<compile_context>
chip_gen: v7x
topology: tpu7x:2x2x1
jax: 0.10.0
libtpu: 0.0.40
codegen_flags: <defaults>
</compile_context>

<pallas_src>
import functools

import jax
import jax.numpy as jnp
from jax import lax
from jax.experimental import pallas as pl
from jax.experimental.pallas import tpu as pltpu


def circuit_kernel(
    xs_ref,       # (T, B, input_dim)                     inputs (VMEM-resident)
    rv0_ref,      # (B, read_vec_dim)                     initial read vector
    wc_ref,       # (input_dim + read_vec_dim, hidden)    fused controller weight
    bc_ref,       # (1, hidden)
    wk_ref,       # (hidden, H*mem_wid)                   all-head key weight
    bk_ref,       # (1, H*mem_wid)
    wo_ref,       # (hidden + read_vec_dim, output_dim)   fused hid_to_out weight
    bo_ref,       # (1, output_dim)
    mscore_ref,   # (H*mem_wid, H*mem_hei)   block-diag(mem^T): all-head scores
    seg_ref,      # (H*mem_hei, H*mem_hei)   block-diag(ones): segmented softmax sums
    mread_ref,    # (H*mem_hei, H*mem_wid)   block-diag(mem):  all-head reads
    out_ref,      # (T, B, output_dim)                    per-step outputs (resident)
    rv_out_ref,   # (B, read_vec_dim)                     final read vector
    hid_out_ref,  # (B, hidden)                           final hidden state
    *,
    seq_len,
    clip_value,
):
    # Weights / memory tables stay in vregs-or-VMEM across the whole rollout.
    wc = wc_ref[...]
    bc = bc_ref[...]
    wk = wk_ref[...]
    bk = bk_ref[...]
    wo = wo_ref[...]
    bo = bo_ref[...]
    mscore = mscore_ref[...]
    seg = seg_ref[...]
    mread = mread_ref[...]

    batch = rv0_ref.shape[0]
    hidden_dim = wc.shape[1]

    def step(t, carry):
        rv, _ = carry
        x = xs_ref[t]                                          # (B, input_dim)

        # ---- Controller.forward(input, read_vec): Linear(cat(x, rv)) + tanh ----
        xr = jnp.concatenate([x, rv], axis=-1)
        hidden = jnp.tanh(
            jnp.dot(xr, wc, preferred_element_type=jnp.float32) + bc
        )
        # NOTE: no clip here - tanh output is already in [-1, 1], so the clamp
        # at +/-clip_value (=20) would be a no-op; only the hid_to_out
        # pre-activation is clipped below (matches the base-class forward).

        # ---- Accessor.forward(hidden): content-addressed read heads, batched ----
        # TODO(synk): the PyTorch base class leaves controller/accessor abstract
        # (no write heads / usage / temporal links); this is the read path only.
        keys = jnp.dot(hidden, wk, preferred_element_type=jnp.float32) + bk   # (B, H*W)
        scores = jnp.dot(keys, mscore, preferred_element_type=jnp.float32)    # (B, H*Mh)
        # Segmented softmax: a single global max (shift-invariant per head),
        # per-head sums via the block-ones matmul (already broadcast per lane).
        p = jnp.exp(scores - scores.max(axis=-1, keepdims=True))
        denom = jnp.dot(p, seg, preferred_element_type=jnp.float32)
        w = p * pl.reciprocal(denom, approx=True)
        new_rv = jnp.dot(w, mread, preferred_element_type=jnp.float32)        # (B, H*W) lane-dense

        # ---- hid_to_out(cat(hidden, read_vec)) -> clamp -> sigmoid ----
        hr = jnp.concatenate([hidden, new_rv], axis=-1)
        pre = jnp.dot(hr, wo, preferred_element_type=jnp.float32) + bo
        out = jax.nn.sigmoid(jnp.clip(pre, -clip_value, clip_value))
        out_ref[t] = out.astype(out_ref.dtype)

        return new_rv, hidden

    rv0 = rv0_ref[...].astype(jnp.float32)
    hid0 = jnp.zeros((batch, hidden_dim), jnp.float32)
    rv_final, hid_final = lax.fori_loop(0, seq_len, step, (rv0, hid0), unroll=True)

    rv_out_ref[...] = rv_final.astype(rv_out_ref.dtype)
    hid_out_ref[...] = hid_final.astype(hid_out_ref.dtype)


def circuit_rollout(xs, read_vec0, params, *, clip_value, num_read_heads, mem_wid):
    """Run T recurrent Circuit steps in one pallas_call (no grid, all resident)."""
    T, B, input_dim = xs.shape
    read_vec_dim = read_vec0.shape[1]
    hidden_dim = params["wcx"].shape[1]
    output_dim = params["woh"].shape[1]
    mem = params["memory"]
    mem_hei = mem.shape[0]
    H = num_read_heads

    # Fused concat-weights: Linear(cat(a, b)) == cat(a, b) @ vstack([Wa, Wb]).
    wc = jnp.concatenate([params["wcx"], params["wcr"]], axis=0)
    wo = jnp.concatenate([params["woh"], params["wor"]], axis=0)

    # Block-diagonal memory tables so all H heads are addressed / read with a
    # single MXU op each (memory is read-only during the rollout).
    eye_h = jnp.eye(H, dtype=mem.dtype)
    mem_scoreT = jnp.kron(eye_h, mem.T)                                 # (H*W, H*Mh)
    mem_read = jnp.kron(eye_h, mem)                                     # (H*Mh, H*W)
    seg = jnp.kron(eye_h, jnp.ones((mem_hei, mem_hei), mem.dtype))      # (H*Mh, H*Mh)

    kernel = functools.partial(circuit_kernel, seq_len=T, clip_value=clip_value)

    outputs, new_read_vec, hidden = pl.pallas_call(
        kernel,
        out_shape=(
            jax.ShapeDtypeStruct((T, B, output_dim), jnp.float32),
            jax.ShapeDtypeStruct((B, read_vec_dim), jnp.float32),
            jax.ShapeDtypeStruct((B, hidden_dim), jnp.float32),
        ),
    )(
        xs, read_vec0,
        wc, params["bc"],
        params["wk"], params["bk"],
        wo, params["bo"],
        mem_scoreT, seg, mem_read,
    )
    return outputs, new_read_vec, hidden


def circuit_forward(x, read_vec, params, *, clip_value, num_read_heads, mem_wid):
    """Single-step forward matching the PyTorch module's return shapes."""
    outputs, new_read_vec, hidden = circuit_rollout(
        x[None], read_vec, params,
        clip_value=clip_value, num_read_heads=num_read_heads, mem_wid=mem_wid,
    )
    B, output_dim = x.shape[0], params["woh"].shape[1]
    return outputs.reshape(1, B, output_dim), new_read_vec, hidden


def circuit_reference(xs, rv0, params, *, clip_value, num_read_heads, mem_wid):
    """Pure-JAX reference (matches the original per-step PyTorch math)."""
    mem = params["memory"]

    def step(rv, x):
        hidden = jnp.tanh(x @ params["wcx"] + rv @ params["wcr"] + params["bc"])
        keys = hidden @ params["wk"] + params["bk"]
        reads = []
        for h in range(num_read_heads):
            k = keys[:, h * mem_wid:(h + 1) * mem_wid]
            w = jax.nn.softmax(k @ mem.T, axis=-1)
            reads.append(w @ mem)
        new_rv = jnp.concatenate(reads, axis=-1)
        pre = hidden @ params["woh"] + new_rv @ params["wor"] + params["bo"]
        out = jax.nn.sigmoid(jnp.clip(pre, -clip_value, clip_value))
        return new_rv, (out, hidden)

    rv, (outs, hiddens) = lax.scan(step, rv0, xs)
    return outs, rv, hiddens[-1]


def make_params(key, *, input_dim, hidden_dim, output_dim,
                num_read_heads, mem_hei, mem_wid):
    read_vec_dim = num_read_heads * mem_wid
    ks = jax.random.split(key, 8)
    s = 0.1
    return {
        "memory": s * jax.random.normal(ks[0], (mem_hei, mem_wid), jnp.float32),
        "wcx": s * jax.random.normal(ks[1], (input_dim, hidden_dim), jnp.float32),
        "wcr": s * jax.random.normal(ks[2], (read_vec_dim, hidden_dim), jnp.float32),
        "bc": jnp.zeros((1, hidden_dim), jnp.float32),
        "wk": s * jax.random.normal(ks[3], (hidden_dim, num_read_heads * mem_wid), jnp.float32),
        "bk": jnp.zeros((1, num_read_heads * mem_wid), jnp.float32),
        "woh": s * jax.random.normal(ks[4], (hidden_dim, output_dim), jnp.float32),
        "wor": s * jax.random.normal(ks[5], (read_vec_dim, output_dim), jnp.float32),
        "bo": jnp.zeros((1, output_dim), jnp.float32),
    }


if __name__ == "__main__":
    # Small shapes consistent with the module's args.
    T = 4
    batch_size = 2
    input_dim = 8
    hidden_dim = 32
    output_dim = 8
    num_read_heads = 2
    mem_hei = 16
    mem_wid = 16
    clip_value = 20.0
    read_vec_dim = num_read_heads * mem_wid

    key = jax.random.PRNGKey(0)
    k_in, k_par = jax.random.split(key)

    xs = jax.random.normal(k_in, (T, batch_size, input_dim), jnp.float32)
    # _reset(): read_vec_ts = zeros(batch, read_vec_dim).fill_(1e-6)
    read_vec0 = jnp.full((batch_size, read_vec_dim), 1e-6, jnp.float32)

    params = make_params(
        k_par,
        input_dim=input_dim,
        hidden_dim=hidden_dim,
        output_dim=output_dim,
        num_read_heads=num_read_heads,
        mem_hei=mem_hei,
        mem_wid=mem_wid,
    )

    # Fused T-step rollout (one kernel invocation, everything VMEM-resident).
    outputs, new_read_vec, hidden = circuit_rollout(
        xs, read_vec0, params,
        clip_value=clip_value,
        num_read_heads=num_read_heads,
        mem_wid=mem_wid,
    )
    jax.block_until_ready((outputs, new_read_vec, hidden))

    assert outputs.shape == (T, batch_size, output_dim)
    assert new_read_vec.shape == (batch_size, read_vec_dim)
    assert hidden.shape == (batch_size, hidden_dim)

    # Single-step API matching the PyTorch forward's .view(1, batch, output_dim).
    out1, rv1, hid1 = circuit_forward(
        xs[0], read_vec0, params,
        clip_value=clip_value,
        num_read_heads=num_read_heads,
        mem_wid=mem_wid,
    )
    jax.block_until_ready((out1, rv1, hid1))
    assert out1.shape == (1, batch_size, output_dim)

    # Correctness vs. pure-JAX reference (loose tol: approx reciprocal in softmax).
    ref_out, ref_rv, ref_hid = circuit_reference(
        xs, read_vec0, params,
        clip_value=clip_value,
        num_read_heads=num_read_heads,
        mem_wid=mem_wid,
    )
    assert jnp.max(jnp.abs(outputs - ref_out)) < 1e-2
    assert jnp.max(jnp.abs(new_read_vec - ref_rv)) < 1e-2
    assert jnp.max(jnp.abs(hidden - ref_hid)) < 1e-2

    print("KERNEL_OK")
</pallas_src>

<mosaic_0001>
module attributes {stable_mosaic.version = 11 : i64} {
  func.func @circuit_kernel(%arg0: memref<4x2x8xf32, #tpu.memory_space<vmem>>, %arg1: memref<2x32xf32, #tpu.memory_space<vmem>>, %arg2: memref<40x32xf32, #tpu.memory_space<vmem>>, %arg3: memref<1x32xf32, #tpu.memory_space<vmem>>, %arg4: memref<32x32xf32, #tpu.memory_space<vmem>>, %arg5: memref<1x32xf32, #tpu.memory_space<vmem>>, %arg6: memref<64x8xf32, #tpu.memory_space<vmem>>, %arg7: memref<1x8xf32, #tpu.memory_space<vmem>>, %arg8: memref<32x32xf32, #tpu.memory_space<vmem>>, %arg9: memref<32x32xf32, #tpu.memory_space<vmem>>, %arg10: memref<32x32xf32, #tpu.memory_space<vmem>>, %arg11: memref<4x2x8xf32, #tpu.memory_space<vmem>>, %arg12: memref<2x32xf32, #tpu.memory_space<vmem>>, %arg13: memref<2x32xf32, #tpu.memory_space<vmem>>) attributes {dimension_semantics = [], scalar_prefetch = 0 : i64, scratch_operands = 0 : i64, tpu.core_type = #tpu.core_type<tc>} {
    %c0 = arith.constant 0 : index
    %c0_0 = arith.constant 0 : index
    %0 = vector.load %arg2[%c0, %c0_0] : memref<40x32xf32, #tpu.memory_space<vmem>>, vector<40x32xf32>
    %c0_1 = arith.constant 0 : index
    %c0_2 = arith.constant 0 : index
    %1 = vector.load %arg3[%c0_1, %c0_2] : memref<1x32xf32, #tpu.memory_space<vmem>>, vector<1x32xf32>
    %c0_3 = arith.constant 0 : index
    %c0_4 = arith.constant 0 : index
    %2 = vector.load %arg4[%c0_3, %c0_4] : memref<32x32xf32, #tpu.memory_space<vmem>>, vector<32x32xf32>
    %c0_5 = arith.constant 0 : index
    %c0_6 = arith.constant 0 : index
    %3 = vector.load %arg5[%c0_5, %c0_6] : memref<1x32xf32, #tpu.memory_space<vmem>>, vector<1x32xf32>
    %c0_7 = arith.constant 0 : index
    %c0_8 = arith.constant 0 : index
    %4 = vector.load %arg6[%c0_7, %c0_8] : memref<64x8xf32, #tpu.memory_space<vmem>>, vector<64x8xf32>
    %c0_9 = arith.constant 0 : index
    %c0_10 = arith.constant 0 : index
    %5 = vector.load %arg7[%c0_9, %c0_10] : memref<1x8xf32, #tpu.memory_space<vmem>>, vector<1x8xf32>
    %c0_11 = arith.constant 0 : index
    %c0_12 = arith.constant 0 : index
    %6 = vector.load %arg8[%c0_11, %c0_12] : memref<32x32xf32, #tpu.memory_space<vmem>>, vector<32x32xf32>
    %c0_13 = arith.constant 0 : index
    %c0_14 = arith.constant 0 : index
    %7 = vector.load %arg9[%c0_13, %c0_14] : memref<32x32xf32, #tpu.memory_space<vmem>>, vector<32x32xf32>
    %c0_15 = arith.constant 0 : index
    %c0_16 = arith.constant 0 : index
    %8 = vector.load %arg10[%c0_15, %c0_16] : memref<32x32xf32, #tpu.memory_space<vmem>>, vector<32x32xf32>
    %c0_17 = arith.constant 0 : index
    %c0_18 = arith.constant 0 : index
    %9 = vector.load %arg1[%c0_17, %c0_18] : memref<2x32xf32, #tpu.memory_space<vmem>>, vector<2x32xf32>
    %cst = arith.constant 0.000000e+00 : f32
    %10 = vector.broadcast %cst : f32 to vector<2x32xf32>
    %c0_i32 = arith.constant 0 : i32
    %11 = arith.index_cast %c0_i32 : i32 to index
    %c0_19 = arith.constant 0 : index
    %c0_20 = arith.constant 0 : index
    %12 = vector.load %arg0[%11, %c0_19, %c0_20] : memref<4x2x8xf32, #tpu.memory_space<vmem>>, vector<1x2x8xf32>
    %13 = vector.shape_cast %12 : vector<1x2x8xf32> to vector<2x8xf32>
    %14 = tpu.concatenate %13, %9 in 1 : vector<2x8xf32>, vector<2x32xf32> -> vector<2x40xf32>
    %cst_21 = arith.constant dense<0.000000e+00> : vector<2x32xf32>
    %15 = tpu.matmul %14, %0, %cst_21 {dimension_numbers = #tpu.dot_dimension_numbers<[1], [0], [0], [1], [0, 0, 1, 1], [], []>} : vector<2x40xf32>, vector<40x32xf32>, vector<2x32xf32> -> vector<2x32xf32>
    %16 = vector.broadcast %1 : vector<1x32xf32> to vector<2x32xf32>
    %17 = arith.addf %15, %16 : vector<2x32xf32>
    %18 = math.tanh %17 : vector<2x32xf32>
    %cst_22 = arith.constant dense<0.000000e+00> : vector<2x32xf32>
    %19 = tpu.matmul %18, %2, %cst_22 {dimension_numbers = #tpu.dot_dimension_numbers<[1], [0], [0], [1], [0, 0, 1, 1], [], []>} : vector<2x32xf32>, vector<32x32xf32>, vector<2x32xf32> -> vector<2x32xf32>
    %20 = vector.broadcast %3 : vector<1x32xf32> to vector<2x32xf32>
    %21 = arith.addf %19, %20 : vector<2x32xf32>
    %cst_23 = arith.constant dense<0.000000e+00> : vector<2x32xf32>
    %22 = tpu.matmul %21, %6, %cst_23 {dimension_numbers = #tpu.dot_dimension_numbers<[1], [0], [0], [1], [0, 0, 1, 1], [], []>} : vector<2x32xf32>, vector<32x32xf32>, vector<2x32xf32> -> vector<2x32xf32>
    %cst_24 = arith.constant dense<0xFF800000> : vector<2xf32>
    %23 = vector.multi_reduction <maximumf>, %22, %cst_24 [1] : vector<2x32xf32> to vector<2xf32>
    %24 = vector.shape_cast %23 : vector<2xf32> to vector<2x1xf32>
    %25 = vector.broadcast %24 : vector<2x1xf32> to vector<2x32xf32>
    %26 = arith.subf %22, %25 : vector<2x32xf32>
    %27 = math.exp %26 : vector<2x32xf32>
    %cst_25 = arith.constant dense<0.000000e+00> : vector<2x32xf32>
    %28 = tpu.matmul %27, %7, %cst_25 {dimension_numbers = #tpu.dot_dimension_numbers<[1], [0], [0], [1], [0, 0, 1, 1], [], []>} : vector<2x32xf32>, vector<32x32xf32>, vector<2x32xf32> -> vector<2x32xf32>
    %29 = tpu.reciprocal %28 {approx = true} : vector<2x32xf32> -> vector<2x32xf32>
    %30 = arith.mulf %27, %29 : vector<2x32xf32>
    %cst_26 = arith.constant dense<0.000000e+00> : vector<2x32xf32>
    %31 = tpu.matmul %30, %8, %cst_26 {dimension_numbers = #tpu.dot_dimension_numbers<[1], [0], [0], [1], [0, 0, 1, 1], [], []>} : vector<2x32xf32>, vector<32x32xf32>, vector<2x32xf32> -> vector<2x32xf32>
    %32 = tpu.concatenate %18, %31 in 1 : vector<2x32xf32>, vector<2x32xf32> -> vector<2x64xf32>
    %cst_27 = arith.constant dense<0.000000e+00> : vector<2x8xf32>
    %33 = tpu.matmul %32, %4, %cst_27 {dimension_numbers = #tpu.dot_dimension_numbers<[1], [0], [0], [1], [0, 0, 1, 1], [], []>} : vector<2x64xf32>, vector<64x8xf32>, vector<2x8xf32> -> vector<2x8xf32>
    %34 = vector.broadcast %5 : vector<1x8xf32> to vector<2x8xf32>
    %35 = arith.addf %33, %34 : vector<2x8xf32>
    %cst_28 = arith.constant -2.000000e+01 : f32
    %cst_29 = arith.constant 2.000000e+01 : f32
    %36 = vector.broadcast %cst_28 : f32 to vector<2x8xf32>
    %37 = arith.maximumf %36, %35 : vector<2x8xf32>
    %38 = vector.broadcast %cst_29 : f32 to vector<2x8xf32>
    %39 = arith.minimumf %38, %37 : vector<2x8xf32>
    %40 = arith.negf %39 : vector<2x8xf32>
    %41 = math.exp %40 : vector<2x8xf32>
    %cst_30 = arith.constant 1.000000e+00 : f32
    %42 = vector.broadcast %cst_30 : f32 to vector<2x8xf32>
    %43 = arith.addf %42, %41 : vector<2x8xf32>
    %44 = arith.divf %42, %43 : vector<2x8xf32>
    %45 = arith.index_cast %c0_i32 : i32 to index
    %c0_31 = arith.constant 0 : index
    %c0_32 = arith.constant 0 : index
    %46 = vector.load %arg11[%45, %c0_31, %c0_32] : memref<4x2x8xf32, #tpu.memory_space<vmem>>, vector<1x2x8xf32>
    %47 = vector.shape_cast %46 : vector<1x2x8xf32> to vector<2x8xf32>
    %48 = vector.shape_cast %44 : vector<2x8xf32> to vector<1x2x8xf32>
    tpu.vector_store %arg11[%45, %c0_31, %c0_32], %48 {strides = array<i32>} : memref<4x2x8xf32, #tpu.memory_space<vmem>>, vector<1x2x8xf32>,
    %c1_i32 = arith.constant 1 : i32
    %49 = arith.index_cast %c1_i32 : i32 to index
    %c0_33 = arith.constant 0 : index
    %c0_34 = arith.constant 0 : index
    %50 = vector.load %arg0[%49, %c0_33, %c0_34] : memref<4x2x8xf32, #tpu.memory_space<vmem>>, vector<1x2x8xf32>
    %51 = vector.shape_cast %50 : vector<1x2x8xf32> to vector<2x8xf32>
    %52 = tpu.concatenate %51, %31 in 1 : vector<2x8xf32>, vector<2x32xf32> -> vector<2x40xf32>
    %cst_35 = arith.constant dense<0.000000e+00> : vector<2x32xf32>
    %53 = tpu.matmul %52, %0, %cst_35 {dimension_numbers = #tpu.dot_dimension_numbers<[1], [0], [0], [1], [0, 0, 1, 1], [], []>} : vector<2x40xf32>, vector<40x32xf32>, vector<2x32xf32> -> vector<2x32xf32>
    %54 = vector.broadcast %1 : vector<1x32xf32> to vector<2x32xf32>
    %55 = arith.addf %53, %54 : vector<2x32xf32>
    %56 = math.tanh %55 : vector<2x32xf32>
    %cst_36 = arith.constant dense<0.000000e+00> : vector<2x32xf32>
    %57 = tpu.matmul %56, %2, %cst_36 {dimension_numbers = #tpu.dot_dimension_numbers<[1], [0], [0], [1], [0, 0, 1, 1], [], []>} : vector<2x32xf32>, vector<32x32xf32>, vector<2x32xf32> -> vector<2x32xf32>
    %58 = vector.broadcast %3 : vector<1x32xf32> to vector<2x32xf32>
    %59 = arith.addf %57, %58 : vector<2x32xf32>
    %cst_37 = arith.constant dense<0.000000e+00> : vector<2x32xf32>
    %60 = tpu.matmul %59, %6, %cst_37 {dimension_numbers = #tpu.dot_dimension_numbers<[1], [0], [0], [1], [0, 0, 1, 1], [], []>} : vector<2x32xf32>, vector<32x32xf32>, vector<2x32xf32> -> vector<2x32xf32>
    %cst_38 = arith.constant dense<0xFF800000> : vector<2xf32>
    %61 = vector.multi_reduction <maximumf>, %60, %cst_38 [1] : vector<2x32xf32> to vector<2xf32>
    %62 = vector.shape_cast %61 : vector<2xf32> to vector<2x1xf32>
    %63 = vector.broadcast %62 : vector<2x1xf32> to vector<2x32xf32>
    %64 = arith.subf %60, %63 : vector<2x32xf32>
    %65 = math.exp %64 : vector<2x32xf32>
    %cst_39 = arith.constant dense<0.000000e+00> : vector<2x32xf32>
    %66 = tpu.matmul %65, %7, %cst_39 {dimension_numbers = #tpu.dot_dimension_numbers<[1], [0], [0], [1], [0, 0, 1, 1], [], []>} : vector<2x32xf32>, vector<32x32xf32>, vector<2x32xf32> -> vector<2x32xf32>
    %67 = tpu.reciprocal %66 {approx = true} : vector<2x32xf32> -> vector<2x32xf32>
    %68 = arith.mulf %65, %67 : vector<2x32xf32>
    %cst_40 = arith.constant dense<0.000000e+00> : vector<2x32xf32>
    %69 = tpu.matmul %68, %8, %cst_40 {dimension_numbers = #tpu.dot_dimension_numbers<[1], [0], [0], [1], [0, 0, 1, 1], [], []>} : vector<2x32xf32>, vector<32x32xf32>, vector<2x32xf32> -> vector<2x32xf32>
    %70 = tpu.concatenate %56, %69 in 1 : vector<2x32xf32>, vector<2x32xf32> -> vector<2x64xf32>
    %cst_41 = arith.constant dense<0.000000e+00> : vector<2x8xf32>
    %71 = tpu.matmul %70, %4, %cst_41 {dimension_numbers = #tpu.dot_dimension_numbers<[1], [0], [0], [1], [0, 0, 1, 1], [], []>} : vector<2x64xf32>, vector<64x8xf32>, vector<2x8xf32> -> vector<2x8xf32>
    %72 = vector.broadcast %5 : vector<1x8xf32> to vector<2x8xf32>
    %73 = arith.addf %71, %72 : vector<2x8xf32>
    %cst_42 = arith.constant -2.000000e+01 : f32
    %cst_43 = arith.constant 2.000000e+01 : f32
    %74 = vector.broadcast %cst_42 : f32 to vector<2x8xf32>
    %75 = arith.maximumf %74, %73 : vector<2x8xf32>
    %76 = vector.broadcast %cst_43 : f32 to vector<2x8xf32>
    %77 = arith.minimumf %76, %75 : vector<2x8xf32>
    %78 = arith.negf %77 : vector<2x8xf32>
    %79 = math.exp %78 : vector<2x8xf32>
    %cst_44 = arith.constant 1.000000e+00 : f32
    %80 = vector.broadcast %cst_44 : f32 to vector<2x8xf32>
    %81 = arith.addf %80, %79 : vector<2x8xf32>
    %82 = arith.divf %80, %81 : vector<2x8xf32>
    %83 = arith.index_cast %c1_i32 : i32 to index
    %c0_45 = arith.constant 0 : index
    %c0_46 = arith.constant 0 : index
    %84 = vector.load %arg11[%83, %c0_45, %c0_46] : memref<4x2x8xf32, #tpu.memory_space<vmem>>, vector<1x2x8xf32>
    %85 = vector.shape_cast %84 : vector<1x2x8xf32> to vector<2x8xf32>
    %86 = vector.shape_cast %82 : vector<2x8xf32> to vector<1x2x8xf32>
    tpu.vector_store %arg11[%83, %c0_45, %c0_46], %86 {strides = array<i32>} : memref<4x2x8xf32, #tpu.memory_space<vmem>>, vector<1x2x8xf32>,
    %c2_i32 = arith.constant 2 : i32
    %87 = arith.index_cast %c2_i32 : i32 to index
    %c0_47 = arith.constant 0 : index
    %c0_48 = arith.constant 0 : index
    %88 = vector.load %arg0[%87, %c0_47, %c0_48] : memref<4x2x8xf32, #tpu.memory_space<vmem>>, vector<1x2x8xf32>
    %89 = vector.shape_cast %88 : vector<1x2x8xf32> to vector<2x8xf32>
    %90 = tpu.concatenate %89, %69 in 1 : vector<2x8xf32>, vector<2x32xf32> -> vector<2x40xf32>
    %cst_49 = arith.constant dense<0.000000e+00> : vector<2x32xf32>
    %91 = tpu.matmul %90, %0, %cst_49 {dimension_numbers = #tpu.dot_dimension_numbers<[1], [0], [0], [1], [0, 0, 1, 1], [], []>} : vector<2x40xf32>, vector<40x32xf32>, vector<2x32xf32> -> vector<2x32xf32>
    %92 = vector.broadcast %1 : vector<1x32xf32> to vector<2x32xf32>
    %93 = arith.addf %91, %92 : vector<2x32xf32>
    %94 = math.tanh %93 : vector<2x32xf32>
    %cst_50 = arith.constant dense<0.000000e+00> : vector<2x32xf32>
    %95 = tpu.matmul %94, %2, %cst_50 {dimension_numbers = #tpu.dot_dimension_numbers<[1], [0], [0], [1], [0, 0, 1, 1], [], []>} : vector<2x32xf32>, vector<32x32xf32>, vector<2x32xf32> -> vector<2x32xf32>
    %96 = vector.broadcast %3 : vector<1x32xf32> to vector<2x32xf32>
    %97 = arith.addf %95, %96 : vector<2x32xf32>
    %cst_51 = arith.constant dense<0.000000e+00> : vector<2x32xf32>
    %98 = tpu.matmul %97, %6, %cst_51 {dimension_numbers = #tpu.dot_dimension_numbers<[1], [0], [0], [1], [0, 0, 1, 1], [], []>} : vector<2x32xf32>, vector<32x32xf32>, vector<2x32xf32> -> vector<2x32xf32>
    %cst_52 = arith.constant dense<0xFF800000> : vector<2xf32>
    %99 = vector.multi_reduction <maximumf>, %98, %cst_52 [1] : vector<2x32xf32> to vector<2xf32>
    %100 = vector.shape_cast %99 : vector<2xf32> to vector<2x1xf32>
    %101 = vector.broadcast %100 : vector<2x1xf32> to vector<2x32xf32>
    %102 = arith.subf %98, %101 : vector<2x32xf32>
    %103 = math.exp %102 : vector<2x32xf32>
    %cst_53 = arith.constant dense<0.000000e+00> : vector<2x32xf32>
    %104 = tpu.matmul %103, %7, %cst_53 {dimension_numbers = #tpu.dot_dimension_numbers<[1], [0], [0], [1], [0, 0, 1, 1], [], []>} : vector<2x32xf32>, vector<32x32xf32>, vector<2x32xf32> -> vector<2x32xf32>
    %105 = tpu.reciprocal %104 {approx = true} : vector<2x32xf32> -> vector<2x32xf32>
    %106 = arith.mulf %103, %105 : vector<2x32xf32>
    %cst_54 = arith.constant dense<0.000000e+00> : vector<2x32xf32>
    %107 = tpu.matmul %106, %8, %cst_54 {dimension_numbers = #tpu.dot_dimension_numbers<[1], [0], [0], [1], [0, 0, 1, 1], [], []>} : vector<2x32xf32>, vector<32x32xf32>, vector<2x32xf32> -> vector<2x32xf32>
    %108 = tpu.concatenate %94, %107 in 1 : vector<2x32xf32>, vector<2x32xf32> -> vector<2x64xf32>
    %cst_55 = arith.constant dense<0.000000e+00> : vector<2x8xf32>
    %109 = tpu.matmul %108, %4, %cst_55 {dimension_numbers = #tpu.dot_dimension_numbers<[1], [0], [0], [1], [0, 0, 1, 1], [], []>} : vector<2x64xf32>, vector<64x8xf32>, vector<2x8xf32> -> vector<2x8xf32>
    %110 = vector.broadcast %5 : vector<1x8xf32> to vector<2x8xf32>
    %111 = arith.addf %109, %110 : vector<2x8xf32>
    %cst_56 = arith.constant -2.000000e+01 : f32
    %cst_57 = arith.constant 2.000000e+01 : f32
    %112 = vector.broadcast %cst_56 : f32 to vector<2x8xf32>
    %113 = arith.maximumf %112, %111 : vector<2x8xf32>
    %114 = vector.broadcast %cst_57 : f32 to vector<2x8xf32>
    %115 = arith.minimumf %114, %113 : vector<2x8xf32>
    %116 = arith.negf %115 : vector<2x8xf32>
    %117 = math.exp %116 : vector<2x8xf32>
    %cst_58 = arith.constant 1.000000e+00 : f32
    %118 = vector.broadcast %cst_58 : f32 to vector<2x8xf32>
    %119 = arith.addf %118, %117 : vector<2x8xf32>
    %120 = arith.divf %118, %119 : vector<2x8xf32>
    %121 = arith.index_cast %c2_i32 : i32 to index
    %c0_59 = arith.constant 0 : index
    %c0_60 = arith.constant 0 : index
    %122 = vector.load %arg11[%121, %c0_59, %c0_60] : memref<4x2x8xf32, #tpu.memory_space<vmem>>, vector<1x2x8xf32>
    %123 = vector.shape_cast %122 : vector<1x2x8xf32> to vector<2x8xf32>
    %124 = vector.shape_cast %120 : vector<2x8xf32> to vector<1x2x8xf32>
    tpu.vector_store %arg11[%121, %c0_59, %c0_60], %124 {strides = array<i32>} : memref<4x2x8xf32, #tpu.memory_space<vmem>>, vector<1x2x8xf32>,
    %c3_i32 = arith.constant 3 : i32
    %125 = arith.index_cast %c3_i32 : i32 to index
    %c0_61 = arith.constant 0 : index
    %c0_62 = arith.constant 0 : index
    %126 = vector.load %arg0[%125, %c0_61, %c0_62] : memref<4x2x8xf32, #tpu.memory_space<vmem>>, vector<1x2x8xf32>
    %127 = vector.shape_cast %126 : vector<1x2x8xf32> to vector<2x8xf32>
    %128 = tpu.concatenate %127, %107 in 1 : vector<2x8xf32>, vector<2x32xf32> -> vector<2x40xf32>
    %cst_63 = arith.constant dense<0.000000e+00> : vector<2x32xf32>
    %129 = tpu.matmul %128, %0, %cst_63 {dimension_numbers = #tpu.dot_dimension_numbers<[1], [0], [0], [1], [0, 0, 1, 1], [], []>} : vector<2x40xf32>, vector<40x32xf32>, vector<2x32xf32> -> vector<2x32xf32>
    %130 = vector.broadcast %1 : vector<1x32xf32> to vector<2x32xf32>
    %131 = arith.addf %129, %130 : vector<2x32xf32>
    %132 = math.tanh %131 : vector<2x32xf32>
    %cst_64 = arith.constant dense<0.000000e+00> : vector<2x32xf32>
    %133 = tpu.matmul %132, %2, %cst_64 {dimension_numbers = #tpu.dot_dimension_numbers<[1], [0], [0], [1], [0, 0, 1, 1], [], []>} : vector<2x32xf32>, vector<32x32xf32>, vector<2x32xf32> -> vector<2x32xf32>
    %134 = vector.broadcast %3 : vector<1x32xf32> to vector<2x32xf32>
    %135 = arith.addf %133, %134 : vector<2x32xf32>
    %cst_65 = arith.constant dense<0.000000e+00> : vector<2x32xf32>
    %136 = tpu.matmul %135, %6, %cst_65 {dimension_numbers = #tpu.dot_dimension_numbers<[1], [0], [0], [1], [0, 0, 1, 1], [], []>} : vector<2x32xf32>, vector<32x32xf32>, vector<2x32xf32> -> vector<2x32xf32>
    %cst_66 = arith.constant dense<0xFF800000> : vector<2xf32>
    %137 = vector.multi_reduction <maximumf>, %136, %cst_66 [1] : vector<2x32xf32> to vector<2xf32>
    %138 = vector.shape_cast %137 : vector<2xf32> to vector<2x1xf32>
    %139 = vector.broadcast %138 : vector<2x1xf32> to vector<2x32xf32>
    %140 = arith.subf %136, %139 : vector<2x32xf32>
    %141 = math.exp %140 : vector<2x32xf32>
    %cst_67 = arith.constant dense<0.000000e+00> : vector<2x32xf32>
    %142 = tpu.matmul %141, %7, %cst_67 {dimension_numbers = #tpu.dot_dimension_numbers<[1], [0], [0], [1], [0, 0, 1, 1], [], []>} : vector<2x32xf32>, vector<32x32xf32>, vector<2x32xf32> -> vector<2x32xf32>
    %143 = tpu.reciprocal %142 {approx = true} : vector<2x32xf32> -> vector<2x32xf32>
    %144 = arith.mulf %141, %143 : vector<2x32xf32>
    %cst_68 = arith.constant dense<0.000000e+00> : vector<2x32xf32>
    %145 = tpu.matmul %144, %8, %cst_68 {dimension_numbers = #tpu.dot_dimension_numbers<[1], [0], [0], [1], [0, 0, 1, 1], [], []>} : vector<2x32xf32>, vector<32x32xf32>, vector<2x32xf32> -> vector<2x32xf32>
    %146 = tpu.concatenate %132, %145 in 1 : vector<2x32xf32>, vector<2x32xf32> -> vector<2x64xf32>
    %cst_69 = arith.constant dense<0.000000e+00> : vector<2x8xf32>
    %147 = tpu.matmul %146, %4, %cst_69 {dimension_numbers = #tpu.dot_dimension_numbers<[1], [0], [0], [1], [0, 0, 1, 1], [], []>} : vector<2x64xf32>, vector<64x8xf32>, vector<2x8xf32> -> vector<2x8xf32>
    %148 = vector.broadcast %5 : vector<1x8xf32> to vector<2x8xf32>
    %149 = arith.addf %147, %148 : vector<2x8xf32>
    %cst_70 = arith.constant -2.000000e+01 : f32
    %cst_71 = arith.constant 2.000000e+01 : f32
    %150 = vector.broadcast %cst_70 : f32 to vector<2x8xf32>
    %151 = arith.maximumf %150, %149 : vector<2x8xf32>
    %152 = vector.broadcast %cst_71 : f32 to vector<2x8xf32>
    %153 = arith.minimumf %152, %151 : vector<2x8xf32>
    %154 = arith.negf %153 : vector<2x8xf32>
    %155 = math.exp %154 : vector<2x8xf32>
    %cst_72 = arith.constant 1.000000e+00 : f32
    %156 = vector.broadcast %cst_72 : f32 to vector<2x8xf32>
    %157 = arith.addf %156, %155 : vector<2x8xf32>
    %158 = arith.divf %156, %157 : vector<2x8xf32>
    %159 = arith.index_cast %c3_i32 : i32 to index
    %c0_73 = arith.constant 0 : index
    %c0_74 = arith.constant 0 : index
    %160 = vector.load %arg11[%159, %c0_73, %c0_74] : memref<4x2x8xf32, #tpu.memory_space<vmem>>, vector<1x2x8xf32>
    %161 = vector.shape_cast %160 : vector<1x2x8xf32> to vector<2x8xf32>
    %162 = vector.shape_cast %158 : vector<2x8xf32> to vector<1x2x8xf32>
    tpu.vector_store %arg11[%159, %c0_73, %c0_74], %162 {strides = array<i32>} : memref<4x2x8xf32, #tpu.memory_space<vmem>>, vector<1x2x8xf32>,
    %c4_i32 = arith.constant 4 : i32
    %c0_75 = arith.constant 0 : index
    %c0_76 = arith.constant 0 : index
    %163 = vector.load %arg12[%c0_75, %c0_76] : memref<2x32xf32, #tpu.memory_space<vmem>>, vector<2x32xf32>
    tpu.vector_store %arg12[%c0_75, %c0_76], %145 {strides = array<i32>} : memref<2x32xf32, #tpu.memory_space<vmem>>, vector<2x32xf32>,
    %c0_77 = arith.constant 0 : index
    %c0_78 = arith.constant 0 : index
    %164 = vector.load %arg13[%c0_77, %c0_78] : memref<2x32xf32, #tpu.memory_space<vmem>>, vector<2x32xf32>
    tpu.vector_store %arg13[%c0_77, %c0_78], %132 {strides = array<i32>} : memref<2x32xf32, #tpu.memory_space<vmem>>, vector<2x32xf32>,
    return
  }
}

</mosaic_0001>

<llo_original>
// kernel: tpu_custom_call.1
$region0: #{tpu_custom_call.1}
  #allocation0 [shape = 'u32[]', space=smem, size = 0x4, offset = 0x4, fixed_abs, tag = 'smem constant byte address 0x4 - core index']
  #allocation1 [shape = 'u32[144,128]{1,0:T(1,128)}', space=vmem, size = 0x12000, scoped, tag = 'internal scratch']
  %s0 = inlined_call_operand.vmem [shape: f32[4,2,8], index: 0, kind: input, shape index: {}]
  %s1 = inlined_call_operand.vmem [shape: f32[2,32], index: 1, kind: input, shape index: {}]
  %s2 = inlined_call_operand.vmem [shape: f32[40,32], index: 2, kind: input, shape index: {}]
  %s3 = inlined_call_operand.vmem [shape: f32[1,32], index: 3, kind: input, shape index: {}]
  %s4 = inlined_call_operand.vmem [shape: f32[32,32], index: 4, kind: input, shape index: {}]
  %s5 = inlined_call_operand.vmem [shape: f32[1,32], index: 5, kind: input, shape index: {}]
  %s6 = inlined_call_operand.vmem [shape: f32[64,8], index: 6, kind: input, shape index: {}]
  %s7 = inlined_call_operand.vmem [shape: f32[1,8], index: 7, kind: input, shape index: {}]
  %s8 = inlined_call_operand.vmem [shape: f32[32,32], index: 8, kind: input, shape index: {}]
  %s9 = inlined_call_operand.vmem [shape: f32[32,32], index: 9, kind: input, shape index: {}]
  %s10 = inlined_call_operand.vmem [shape: f32[32,32], index: 10, kind: input, shape index: {}]
  %s11 = inlined_call_operand.hbm [shape: f32[4,2,8], index: 11, kind: output, shape index: {0}]
  %s12 = inlined_call_operand.hbm [shape: f32[2,32], index: 12, kind: output, shape index: {1}]
  %s13 = inlined_call_operand.hbm [shape: f32[2,32], index: 13, kind: output, shape index: {2}]
  %14 = xla_tuple %s11, %s12, %s13
  %s15 = sld [smem:[#allocation0]]
  $region70: #{tpu_custom_call.1} parent=0
    _
  %s17 = ssub.s32 1, %s15
  %s18 = scalar_select 0, %s17, %s15
  $region1: #{tpu_custom_call.1} parent=0
    #allocation2 [shape = 'u8[4096]{0}', space=vmem, size = 0x1000, scoped, tag = 'output window, operand 0, single buffered']
    #allocation3 [shape = 's32[1]{0}', space=sflag, size = 0x4, scoped, tag = 'scoped memory for tpu_custom_call.1']
    #allocation4 [shape = 'u8[1024]{0}', space=vmem, size = 0x400, scoped, tag = 'output window, operand 1, single buffered']
    #allocation5 [shape = 's32[1]{0}', space=sflag, size = 0x4, scoped, tag = 'scoped memory for tpu_custom_call.1']
    #allocation6 [shape = 'u8[1024]{0}', space=vmem, size = 0x400, scoped, tag = 'output window, operand 2, single buffered']
    %19 = vsyncpa [#allocation3], 0
    %20 = vsyncpa [#allocation5], 0
    // Predicated region
    $region2: #{tpu_custom_call.1} parent=1 // pred_check
      _
    $region3: #{tpu_custom_call.1} parent=1 // pred_check_branch
      %22 = sbr.rel (0) target = $region5
    $region4: #{tpu_custom_call.1} parent=1 // pred_region
      _
    $region5: #{tpu_custom_call.1} parent=1 // pred_fallthru
      _
    // Predicated region
    $region6: #{tpu_custom_call.1} parent=1 // pred_check
      _
    $region7: #{tpu_custom_call.1} parent=1 // pred_check_branch
      %24 = sbr.rel (0) target = $region9
    $region8: #{tpu_custom_call.1} parent=1 // pred_region
      _
    $region9: #{tpu_custom_call.1} parent=1 // pred_fallthru
      _
    // Predicated region
    $region10: #{tpu_custom_call.1} parent=1 // pred_check
      _
    $region11: #{tpu_custom_call.1} parent=1 // pred_check_branch
      %26 = sbr.rel (0) target = $region13
    $region12: #{tpu_custom_call.1} parent=1 // pred_region
      _
    $region13: #{tpu_custom_call.1} parent=1 // pred_fallthru
      _
    // Predicated region
    $region14: #{tpu_custom_call.1} parent=1 // pred_check
      _
    $region15: #{tpu_custom_call.1} parent=1 // pred_check_branch
      %28 = sbr.rel (0) target = $region17
    $region16: #{tpu_custom_call.1} parent=1 // pred_region
      _
    $region17: #{tpu_custom_call.1} parent=1 // pred_fallthru
      _
    // Predicated region
    $region18: #{tpu_custom_call.1} parent=1 // pred_check
      _
    $region19: #{tpu_custom_call.1} parent=1 // pred_check_branch
      %30 = sbr.rel (0) target = $region21
    $region20: #{tpu_custom_call.1} parent=1 // pred_region
      _
    $region21: #{tpu_custom_call.1} parent=1 // pred_fallthru
      _
    // Predicated region
    $region22: #{tpu_custom_call.1} parent=1 // pred_check
      _
    $region23: #{tpu_custom_call.1} parent=1 // pred_check_branch
      %32 = sbr.rel (0) target = $region25
    $region24: #{tpu_custom_call.1} parent=1 // pred_region
      _
    $region25: #{tpu_custom_call.1} parent=1 // pred_fallthru
      _
    // Predicated region
    $region26: #{tpu_custom_call.1} parent=1 // pred_check
      _
    $region27: #{tpu_custom_call.1} parent=1 // pred_check_branch
      %34 = sbr.rel (0) target = $region29
    $region28: #{tpu_custom_call.1} parent=1 // pred_region
      _
    $region29: #{tpu_custom_call.1} parent=1 // pred_fallthru
      _
    // Predicated region
    $region30: #{tpu_custom_call.1} parent=1 // pred_check
      _
    $region31: #{tpu_custom_call.1} parent=1 // pred_check_branch
      %36 = sbr.rel (0) target = $region33
    $region32: #{tpu_custom_call.1} parent=1 // pred_region
      _
    $region33: #{tpu_custom_call.1} parent=1 // pred_fallthru
      _
    // Predicated region
    $region34: #{tpu_custom_call.1} parent=1 // pred_check
      _
    $region35: #{tpu_custom_call.1} parent=1 // pred_check_branch
      %38 = sbr.rel (0) target = $region37
    $region36: #{tpu_custom_call.1} parent=1 // pred_region
      _
    $region37: #{tpu_custom_call.1} parent=1 // pred_fallthru
      _
    // Predicated region
    $region38: #{tpu_custom_call.1} parent=1 // pred_check
      _
    $region39: #{tpu_custom_call.1} parent=1 // pred_check_branch
      %40 = sbr.rel (0) target = $region41
    $region40: #{tpu_custom_call.1} parent=1 // pred_region
      _
    $region41: #{tpu_custom_call.1} parent=1 // pred_fallthru
      _
    // Predicated region
    $region42: #{tpu_custom_call.1} parent=1 // pred_check
      _
    $region43: #{tpu_custom_call.1} parent=1 // pred_check_branch
      %42 = sbr.rel (0) target = $region45
    $region44: #{tpu_custom_call.1} parent=1 // pred_region
      _
    $region45: #{tpu_custom_call.1} parent=1 // pred_fallthru
      _
    %v43 = vld [vmem:[%s2] sm:$0xff]
    %v44 = vld [vmem:[%s2 + $0x8] sm:$0xff]
    %v45 = vld [vmem:[%s2 + $0x10] sm:$0xff]
    %v46 = vld [vmem:[%s2 + $0x18] sm:$0xff]
    %v47 = vld [vmem:[%s2 + $0x20] sm:$0xff]
    %v48 = vld [vmem:[%s3] sm:$0x1]
    %v49 = vld [vmem:[%s4] sm:$0xff]
    %v50 = vld [vmem:[%s4 + $0x8] sm:$0xff]
    %v51 = vld [vmem:[%s4 + $0x10] sm:$0xff]
    %v52 = vld [vmem:[%s4 + $0x18] sm:$0xff]
    %v53 = vld [vmem:[%s5] sm:$0x1]
    %v54 = vld [vmem:[%s6] sm:$0xff]
    %v55 = vld [vmem:[%s6 + $0x8] sm:$0xff]
    %v56 = vld [vmem:[%s6 + $0x10] sm:$0xff]
    %v57 = vld [vmem:[%s6 + $0x18] sm:$0xff]
    %v58 = vld [vmem:[%s6 + $0x20] sm:$0xff]
    %v59 = vld [vmem:[%s6 + $0x28] sm:$0xff]
    %v60 = vld [vmem:[%s6 + $0x30] sm:$0xff]
    %v61 = vld [vmem:[%s6 + $0x38] sm:$0xff]
    %v62 = vld [vmem:[%s7] sm:$0x1]
    %v63 = vld [vmem:[%s8] sm:$0xff]
    %v64 = vld [vmem:[%s8 + $0x8] sm:$0xff]
    %v65 = vld [vmem:[%s8 + $0x10] sm:$0xff]
    %v66 = vld [vmem:[%s8 + $0x18] sm:$0xff]
    %v67 = vld [vmem:[%s9] sm:$0xff]
    %v68 = vld [vmem:[%s9 + $0x8] sm:$0xff]
    %v69 = vld [vmem:[%s9 + $0x10] sm:$0xff]
    %v70 = vld [vmem:[%s9 + $0x18] sm:$0xff]
    %v71 = vld [vmem:[%s10] sm:$0xff]
    %v72 = vld [vmem:[%s10 + $0x8] sm:$0xff]
    %v73 = vld [vmem:[%s10 + $0x10] sm:$0xff]
    %v74 = vld [vmem:[%s10 + $0x18] sm:$0xff]
    %v75 = vld [vmem:[%s1] sm:$0x3]
    %v76 = vld [vmem:[%s0] sm:$0x3]
    %78 = vrot.lane.b32.xlu0 %v75, 8
    %v79 = vpop.permute.xlu0 %78
    %vm81 = vcmask 64512
    %v82 = vsel %vm81, %v76, %v79
    %v84 = vlaneseq
    %v85 = vshrl.u32 %v84, 7
    %v86 = vsub.s32 0, %v85
    %v87 = vrot.slane %v48, %v86
    %vm89 = vcmask 326656
    %v91 = vsel %vm89, %v82, 0
    %93 = vmatprep.subr.mxu0 0.0
    %94 = vmatpush1.msra.mxu0 %v43
    %95 = vmatprep.subr.mxu0 0.0
    %96 = vmatpush1.msra.mxu0 %v44
    %97 = vmatprep.subr.mxu0 0.0
    %98 = vmatpush1.msra.mxu0 %v45
    %99 = vmatprep.subr.mxu0 0.0
    %100 = vmatpush1.msra.mxu0 %v46
    %101 = vmatprep.subr.mxu0 0.0
    %102 = vmatpush1.msra.mxu0 %v47
    %103 = vmatprep.subr.mxu0 0.0
    %104 = vmatpush1.msra.mxu0 0.0
    %105 = vmatprep.subr.mxu0 0.0
    %106 = vmatpush1.msra.mxu0 0.0
    %107 = vmatprep.subr.mxu0 0.0
    %108 = vmatpush1.msra.mxu0 0.0
    %109 = vmatprep.subr.mxu0 0.0
    %110 = vmatpush1.msra.mxu0 0.0
    %111 = vmatprep.subr.mxu0 0.0
    %112 = vmatpush1.msra.mxu0 0.0
    %113 = vmatprep.subr.mxu0 0.0
    %114 = vmatpush1.msra.mxu0 0.0
    %115 = vmatprep.subr.mxu0 0.0
    %116 = vmatpush1.msra.mxu0 0.0
    %117 = vmatprep.subr.mxu0 0.0
    %118 = vmatpush1.msra.mxu0 0.0
    %119 = vmatprep.subr.mxu0 0.0
    %120 = vmatpush1.msra.mxu0 0.0
    %121 = vmatprep.subr.mxu0 0.0
    %122 = vmatpush1.msra.mxu0 0.0
    %123 = vmatprep.subr.mxu0 0.0
    %124 = vmatpush1.msra.mxu0 0.0
    %125 = vmatprep.subr.mxu0 0.0
    %126 = vmatpush1.msra.mxu0 0.0
    %127 = vmatprep.subr.mxu0 0.0
    %128 = vmatpush1.msra.mxu0 0.0
    %129 = vmatprep.subr.mxu0 0.0
    %130 = vmatpush1.msra.mxu0 0.0
    %131 = vmatprep.subr.mxu0 0.0
    %132 = vmatpush1.msra.mxu0 0.0
    %133 = vmatprep.subr.mxu0 0.0
    %134 = vmatpush1.msra.mxu0 0.0
    %135 = vmatprep.subr.mxu0 0.0
    %136 = vmatpush1.msra.mxu0 0.0
    %137 = vmatprep.subr.mxu0 0.0
    %138 = vmatpush1.msra.mxu0 0.0
    %139 = vmatprep.subr.mxu0 0.0
    %140 = vmatpush1.msra.mxu0 0.0
    %141 = vmatprep.subr.mxu0 0.0
    %142 = vmatpush1.msra.mxu0 0.0
    %143 = vmatprep.subr.mxu0 0.0
    %144 = vmatpush1.msra.mxu0 0.0
    %145 = vmatprep.subr.mxu0 0.0
    %146 = vmatpush1.msra.mxu0 0.0
    %147 = vmatprep.subr.mxu0 0.0
    %148 = vmatpush1.msra.mxu0 0.0
    %149 = vmatprep.subr.mxu0 0.0
    %150 = vmatpush1.msra.mxu0 0.0
    %151 = vmatprep.subr.mxu0 0.0
    %152 = vmatpush1.msra.mxu0 0.0
    %153 = vmatprep.subr.mxu0 0.0
    %154 = vmatpush1.msra.mxu0 0.0
    %155 = vmatprep.subr.mxu0 0.0
    %156 = vmatpush1.msra.mxu0 0.0
    %157 = vmatprep.mubr.f32.mxu0 0.0
    %158 = vmatmul.mubr.f32.gmra.mrb[0].mxu0 %v91
    %v159 = vpop.f32.mrb[0].mxu0
    %v160 = vadd.f32 %v87, %v159
    %v161 = vpop.f32.mrb[0].mxu0
    %162 = vdwg.mxu0
    %v163 = vtanh.pop %v160
    %v165 = vlaneseq
    %v166 = vshrl.u32 %v165, 7
    %v167 = vsub.s32 0, %v166
    %v168 = vrot.slane %v53, %v167
    %vm170 = vcmask 261120
    %v172 = vsel %vm170, %v163, 0
    %174 = vmatprep.subr.mxu0 0.0
    %175 = vmatpush1.msra.mxu0 %v49
    %176 = vmatprep.subr.mxu0 0.0
    %177 = vmatpush1.msra.mxu0 %v50
    %178 = vmatprep.subr.mxu0 0.0
    %179 = vmatpush1.msra.mxu0 %v51
    %180 = vmatprep.subr.mxu0 0.0
    %181 = vmatpush1.msra.mxu0 %v52
    %182 = vmatprep.subr.mxu0 0.0
    %183 = vmatpush1.msra.mxu0 0.0
    %184 = vmatprep.subr.mxu0 0.0
    %185 = vmatpush1.msra.mxu0 0.0
    %186 = vmatprep.subr.mxu0 0.0
    %187 = vmatpush1.msra.mxu0 0.0
    %188 = vmatprep.subr.mxu0 0.0
    %189 = vmatpush1.msra.mxu0 0.0
    %190 = vmatprep.subr.mxu0 0.0
    %191 = vmatpush1.msra.mxu0 0.0
    %192 = vmatprep.subr.mxu0 0.0
    %193 = vmatpush1.msra.mxu0 0.0
    %194 = vmatprep.subr.mxu0 0.0
    %195 = vmatpush1.msra.mxu0 0.0
    %196 = vmatprep.subr.mxu0 0.0
    %197 = vmatpush1.msra.mxu0 0.0
    %198 = vmatprep.subr.mxu0 0.0
    %199 = vmatpush1.msra.mxu0 0.0
    %200 = vmatprep.subr.mxu0 0.0
    %201 = vmatpush1.msra.mxu0 0.0
    %202 = vmatprep.subr.mxu0 0.0
    %203 = vmatpush1.msra.mxu0 0.0
    %204 = vmatprep.subr.mxu0 0.0
    %205 = vmatpush1.msra.mxu0 0.0
    %206 = vmatprep.subr.mxu0 0.0
    %207 = vmatpush1.msra.mxu0 0.0
    %208 = vmatprep.subr.mxu0 0.0
    %209 = vmatpush1.msra.mxu0 0.0
    %210 = vmatprep.subr.mxu0 0.0
    %211 = vmatpush1.msra.mxu0 0.0
    %212 = vmatprep.subr.mxu0 0.0
    %213 = vmatpush1.msra.mxu0 0.0
    %214 = vmatprep.subr.mxu0 0.0
    %215 = vmatpush1.msra.mxu0 0.0
    %216 = vmatprep.subr.mxu0 0.0
    %217 = vmatpush1.msra.mxu0 0.0
    %218 = vmatprep.subr.mxu0 0.0
    %219 = vmatpush1.msra.mxu0 0.0
    %220 = vmatprep.subr.mxu0 0.0
    %221 = vmatpush1.msra.mxu0 0.0
    %222 = vmatprep.subr.mxu0 0.0
    %223 = vmatpush1.msra.mxu0 0.0
    %224 = vmatprep.subr.mxu0 0.0
    %225 = vmatpush1.msra.mxu0 0.0
    %226 = vmatprep.subr.mxu0 0.0
    %227 = vmatpush1.msra.mxu0 0.0
    %228 = vmatprep.subr.mxu0 0.0
    %229 = vmatpush1.msra.mxu0 0.0
    %230 = vmatprep.subr.mxu0 0.0
    %231 = vmatpush1.msra.mxu0 0.0
    %232 = vmatprep.subr.mxu0 0.0
    %233 = vmatpush1.msra.mxu0 0.0
    %234 = vmatprep.subr.mxu0 0.0
    %235 = vmatpush1.msra.mxu0 0.0
    %236 = vmatprep.subr.mxu0 0.0
    %237 = vmatpush1.msra.mxu0 0.0
    %238 = vmatprep.mubr.f32.mxu0 0.0
    %239 = vmatmul.mubr.f32.gmra.mrb[0].mxu0 %v172
    %v240 = vpop.f32.mrb[0].mxu0
    %v241 = vadd.f32 %v168, %v240
    %v242 = vpop.f32.mrb[0].mxu0
    %243 = vdwg.mxu0
    %v245 = vsel %vm170, %v241, 0
    %247 = vmatprep.subr.mxu0 0.0
    %248 = vmatpush1.msra.mxu0 %v63
    %249 = vmatprep.subr.mxu0 0.0
    %250 = vmatpush1.msra.mxu0 %v64
    %251 = vmatprep.subr.mxu0 0.0
    %252 = vmatpush1.msra.mxu0 %v65
    %253 = vmatprep.subr.mxu0 0.0
    %254 = vmatpush1.msra.mxu0 %v66
    %255 = vmatprep.subr.mxu0 0.0
    %256 = vmatpush1.msra.mxu0 0.0
    %257 = vmatprep.subr.mxu0 0.0
    %258 = vmatpush1.msra.mxu0 0.0
    %259 = vmatprep.subr.mxu0 0.0
    %260 = vmatpush1.msra.mxu0 0.0
    %261 = vmatprep.subr.mxu0 0.0
    %262 = vmatpush1.msra.mxu0 0.0
    %263 = vmatprep.subr.mxu0 0.0
    %264 = vmatpush1.msra.mxu0 0.0
    %265 = vmatprep.subr.mxu0 0.0
    %266 = vmatpush1.msra.mxu0 0.0
    %267 = vmatprep.subr.mxu0 0.0
    %268 = vmatpush1.msra.mxu0 0.0
    %269 = vmatprep.subr.mxu0 0.0
    %270 = vmatpush1.msra.mxu0 0.0
    %271 = vmatprep.subr.mxu0 0.0
    %272 = vmatpush1.msra.mxu0 0.0
    %273 = vmatprep.subr.mxu0 0.0
    %274 = vmatpush1.msra.mxu0 0.0
    %275 = vmatprep.subr.mxu0 0.0
    %276 = vmatpush1.msra.mxu0 0.0
    %277 = vmatprep.subr.mxu0 0.0
    %278 = vmatpush1.msra.mxu0 0.0
    %279 = vmatprep.subr.mxu0 0.0
    %280 = vmatpush1.msra.mxu0 0.0
    %281 = vmatprep.subr.mxu0 0.0
    %282 = vmatpush1.msra.mxu0 0.0
    %283 = vmatprep.subr.mxu0 0.0
    %284 = vmatpush1.msra.mxu0 0.0
    %285 = vmatprep.subr.mxu0 0.0
    %286 = vmatpush1.msra.mxu0 0.0
    %287 = vmatprep.subr.mxu0 0.0
    %288 = vmatpush1.msra.mxu0 0.0
    %289 = vmatprep.subr.mxu0 0.0
    %290 = vmatpush1.msra.mxu0 0.0
    %291 = vmatprep.subr.mxu0 0.0
    %292 = vmatpush1.msra.mxu0 0.0
    %293 = vmatprep.subr.mxu0 0.0
    %294 = vmatpush1.msra.mxu0 0.0
    %295 = vmatprep.subr.mxu0 0.0
    %296 = vmatpush1.msra.mxu0 0.0
    %297 = vmatprep.subr.mxu0 0.0
    %298 = vmatpush1.msra.mxu0 0.0
    %299 = vmatprep.subr.mxu0 0.0
    %300 = vmatpush1.msra.mxu0 0.0
    %301 = vmatprep.subr.mxu0 0.0
    %302 = vmatpush1.msra.mxu0 0.0
    %303 = vmatprep.subr.mxu0 0.0
    %304 = vmatpush1.msra.mxu0 0.0
    %305 = vmatprep.subr.mxu0 0.0
    %306 = vmatpush1.msra.mxu0 0.0
    %307 = vmatprep.subr.mxu0 0.0
    %308 = vmatpush1.msra.mxu0 0.0
    %309 = vmatprep.subr.mxu0 0.0
    %310 = vmatpush1.msra.mxu0 0.0
    %311 = vmatprep.mubr.f32.mxu0 0.0
    %312 = vmatmul.mubr.f32.gmra.mrb[0].mxu0 %v245
    %v313 = vpop.f32.mrb[0].mxu0
    %v314 = vadd.f32 0.0, %v313
    %v315 = vpop.f32.mrb[0].mxu0
    %316 = vdwg.mxu0
    %vm317 = vcmask 254976
    %v318 = vsel %vm317, %v314, -inf
    %319 = vmax.xlane.f32.xlu0 %v318
    %v320 = vpop.xlane.xlu0 %319
    %v321 = vsub.f32 %v314, %v320
    %v322 = vmul.f32 %v321, 1.442695
    %v323 = vpow.pop %v322
    %v325 = vsel %vm170, %v323, 0
    %327 = vmatprep.subr.mxu0 0.0
    %328 = vmatpush1.msra.mxu0 %v67
    %329 = vmatprep.subr.mxu0 0.0
    %330 = vmatpush1.msra.mxu0 %v68
    %331 = vmatprep.subr.mxu0 0.0
    %332 = vmatpush1.msra.mxu0 %v69
    %333 = vmatprep.subr.mxu0 0.0
    %334 = vmatpush1.msra.mxu0 %v70
    %335 = vmatprep.subr.mxu0 0.0
    %336 = vmatpush1.msra.mxu0 0.0
    %337 = vmatprep.subr.mxu0 0.0
    %338 = vmatpush1.msra.mxu0 0.0
    %339 = vmatprep.subr.mxu0 0.0
    %340 = vmatpush1.msra.mxu0 0.0
    %341 = vmatprep.subr.mxu0 0.0
    %342 = vmatpush1.msra.mxu0 0.0
    %343 = vmatprep.subr.mxu0 0.0
    %344 = vmatpush1.msra.mxu0 0.0
    %345 = vmatprep.subr.mxu0 0.0
    %346 = vmatpush1.msra.mxu0 0.0
    %347 = vmatprep.subr.mxu0 0.0
    %348 = vmatpush1.msra.mxu0 0.0
    %349 = vmatprep.subr.mxu0 0.0
    %350 = vmatpush1.msra.mxu0 0.0
    %351 = vmatprep.subr.mxu0 0.0
    %352 = vmatpush1.msra.mxu0 0.0
    %353 = vmatprep.subr.mxu0 0.0
    %354 = vmatpush1.msra.mxu0 0.0
    %355 = vmatprep.subr.mxu0 0.0
    %356 = vmatpush1.msra.mxu0 0.0
    %357 = vmatprep.subr.mxu0 0.0
    %358 = vmatpush1.msra.mxu0 0.0
    %359 = vmatprep.subr.mxu0 0.0
    %360 = vmatpush1.msra.mxu0 0.0
    %361 = vmatprep.subr.mxu0 0.0
    %362 = vmatpush1.msra.mxu0 0.0
    %363 = vmatprep.subr.mxu0 0.0
    %364 = vmatpush1.msra.mxu0 0.0
    %365 = vmatprep.subr.mxu0 0.0
    %366 = vmatpush1.msra.mxu0 0.0
    %367 = vmatprep.subr.mxu0 0.0
    %368 = vmatpush1.msra.mxu0 0.0
    %369 = vmatprep.subr.mxu0 0.0
    %370 = vmatpush1.msra.mxu0 0.0
    %371 = vmatprep.subr.mxu0 0.0
    %372 = vmatpush1.msra.mxu0 0.0
    %373 = vmatprep.subr.mxu0 0.0
    %374 = vmatpush1.msra.mxu0 0.0
    %375 = vmatprep.subr.mxu0 0.0
    %376 = vmatpush1.msra.mxu0 0.0
    %377 = vmatprep.subr.mxu0 0.0
    %378 = vmatpush1.msra.mxu0 0.0
    %379 = vmatprep.subr.mxu0 0.0
    %380 = vmatpush1.msra.mxu0 0.0
    %381 = vmatprep.subr.mxu0 0.0
    %382 = vmatpush1.msra.mxu0 0.0
    %383 = vmatprep.subr.mxu0 0.0
    %384 = vmatpush1.msra.mxu0 0.0
    %385 = vmatprep.subr.mxu0 0.0
    %386 = vmatpush1.msra.mxu0 0.0
    %387 = vmatprep.subr.mxu0 0.0
    %388 = vmatpush1.msra.mxu0 0.0
    %389 = vmatprep.subr.mxu0 0.0
    %390 = vmatpush1.msra.mxu0 0.0
    %391 = vmatprep.mubr.f32.mxu0 0.0
    %392 = vmatmul.mubr.f32.gmra.mrb[0].mxu0 %v325
    %v393 = vpop.f32.mrb[0].mxu0
    %v394 = vadd.f32 0.0, %v393
    %v395 = vpop.f32.mrb[0].mxu0
    %396 = vdwg.mxu0
    %v397 = vrcp.pop %v394
    %v398 = vmul.f32 %v323, %v397
    %v400 = vsel %vm170, %v398, 0
    %402 = vmatprep.subr.mxu0 0.0
    %403 = vmatpush1.msra.mxu0 %v71
    %404 = vmatprep.subr.mxu0 0.0
    %405 = vmatpush1.msra.mxu0 %v72
    %406 = vmatprep.subr.mxu0 0.0
    %407 = vmatpush1.msra.mxu0 %v73
    %408 = vmatprep.subr.mxu0 0.0
    %409 = vmatpush1.msra.mxu0 %v74
    %410 = vmatprep.subr.mxu0 0.0
    %411 = vmatpush1.msra.mxu0 0.0
    %412 = vmatprep.subr.mxu0 0.0
    %413 = vmatpush1.msra.mxu0 0.0
    %414 = vmatprep.subr.mxu0 0.0
    %415 = vmatpush1.msra.mxu0 0.0
    %416 = vmatprep.subr.mxu0 0.0
    %417 = vmatpush1.msra.mxu0 0.0
    %418 = vmatprep.subr.mxu0 0.0
    %419 = vmatpush1.msra.mxu0 0.0
    %420 = vmatprep.subr.mxu0 0.0
    %421 = vmatpush1.msra.mxu0 0.0
    %422 = vmatprep.subr.mxu0 0.0
    %423 = vmatpush1.msra.mxu0 0.0
    %424 = vmatprep.subr.mxu0 0.0
    %425 = vmatpush1.msra.mxu0 0.0
    %426 = vmatprep.subr.mxu0 0.0
    %427 = vmatpush1.msra.mxu0 0.0
    %428 = vmatprep.subr.mxu0 0.0
    %429 = vmatpush1.msra.mxu0 0.0
    %430 = vmatprep.subr.mxu0 0.0
    %431 = vmatpush1.msra.mxu0 0.0
    %432 = vmatprep.subr.mxu0 0.0
    %433 = vmatpush1.msra.mxu0 0.0
    %434 = vmatprep.subr.mxu0 0.0
    %435 = vmatpush1.msra.mxu0 0.0
    %436 = vmatprep.subr.mxu0 0.0
    %437 = vmatpush1.msra.mxu0 0.0
    %438 = vmatprep.subr.mxu0 0.0
    %439 = vmatpush1.msra.mxu0 0.0
    %440 = vmatprep.subr.mxu0 0.0
    %441 = vmatpush1.msra.mxu0 0.0
    %442 = vmatprep.subr.mxu0 0.0
    %443 = vmatpush1.msra.mxu0 0.0
    %444 = vmatprep.subr.mxu0 0.0
    %445 = vmatpush1.msra.mxu0 0.0
    %446 = vmatprep.subr.mxu0 0.0
    %447 = vmatpush1.msra.mxu0 0.0
    %448 = vmatprep.subr.mxu0 0.0
    %449 = vmatpush1.msra.mxu0 0.0
    %450 = vmatprep.subr.mxu0 0.0
    %451 = vmatpush1.msra.mxu0 0.0
    %452 = vmatprep.subr.mxu0 0.0
    %453 = vmatpush1.msra.mxu0 0.0
    %454 = vmatprep.subr.mxu0 0.0
    %455 = vmatpush1.msra.mxu0 0.0
    %456 = vmatprep.subr.mxu0 0.0
    %457 = vmatpush1.msra.mxu0 0.0
    %458 = vmatprep.subr.mxu0 0.0
    %459 = vmatpush1.msra.mxu0 0.0
    %460 = vmatprep.subr.mxu0 0.0
    %461 = vmatpush1.msra.mxu0 0.0
    %462 = vmatprep.subr.mxu0 0.0
    %463 = vmatpush1.msra.mxu0 0.0
    %464 = vmatprep.subr.mxu0 0.0
    %465 = vmatpush1.msra.mxu0 0.0
    %466 = vmatprep.mubr.f32.mxu0 0.0
    %467 = vmatmul.mubr.f32.gmra.mrb[0].mxu0 %v400
    %v468 = vpop.f32.mrb[0].mxu0
    %v469 = vadd.f32 0.0, %v468
    %v470 = vpop.f32.mrb[0].mxu0
    %471 = vdwg.mxu0
    %473 = vrot.lane.b32.xlu0 %v469, 32
    %v474 = vpop.permute.xlu0 %473
    %v476 = vsel %vm170, %v163, %v474
    %v478 = vlaneseq
    %v479 = vshrl.u32 %v478, 7
    %v480 = vsub.s32 0, %v479
    %v481 = vrot.slane %v62, %v480
    %vm483 = vcmask 523264
    %v485 = vsel %vm483, %v476, 0
    %487 = vmatprep.subr.mxu0 0.0
    %488 = vmatpush1.msra.mxu0 %v54
    %489 = vmatprep.subr.mxu0 0.0
    %490 = vmatpush1.msra.mxu0 %v55
    %491 = vmatprep.subr.mxu0 0.0
    %492 = vmatpush1.msra.mxu0 %v56
    %493 = vmatprep.subr.mxu0 0.0
    %494 = vmatpush1.msra.mxu0 %v57
    %495 = vmatprep.subr.mxu0 0.0
    %496 = vmatpush1.msra.mxu0 %v58
    %497 = vmatprep.subr.mxu0 0.0
    %498 = vmatpush1.msra.mxu0 %v59
    %499 = vmatprep.subr.mxu0 0.0
    %500 = vmatpush1.msra.mxu0 %v60
    %501 = vmatprep.subr.mxu0 0.0
    %502 = vmatpush1.msra.mxu0 %v61
    %503 = vmatprep.subr.mxu0 0.0
    %504 = vmatpush1.msra.mxu0 0.0
    %505 = vmatprep.subr.mxu0 0.0
    %506 = vmatpush1.msra.mxu0 0.0
    %507 = vmatprep.subr.mxu0 0.0
    %508 = vmatpush1.msra.mxu0 0.0
    %509 = vmatprep.subr.mxu0 0.0
    %510 = vmatpush1.msra.mxu0 0.0
    %511 = vmatprep.subr.mxu0 0.0
    %512 = vmatpush1.msra.mxu0 0.0
    %513 = vmatprep.subr.mxu0 0.0
    %514 = vmatpush1.msra.mxu0 0.0
    %515 = vmatprep.subr.mxu0 0.0
    %516 = vmatpush1.msra.mxu0 0.0
    %517 = vmatprep.subr.mxu0 0.0
    %518 = vmatpush1.msra.mxu0 0.0
    %519 = vmatprep.subr.mxu0 0.0
    %520 = vmatpush1.msra.mxu0 0.0
    %521 = vmatprep.subr.mxu0 0.0
    %522 = vmatpush1.msra.mxu0 0.0
    %523 = vmatprep.subr.mxu0 0.0
    %524 = vmatpush1.msra.mxu0 0.0
    %525 = vmatprep.subr.mxu0 0.0
    %526 = vmatpush1.msra.mxu0 0.0
    %527 = vmatprep.subr.mxu0 0.0
    %528 = vmatpush1.msra.mxu0 0.0
    %529 = vmatprep.subr.mxu0 0.0
    %530 = vmatpush1.msra.mxu0 0.0
    %531 = vmatprep.subr.mxu0 0.0
    %532 = vmatpush1.msra.mxu0 0.0
    %533 = vmatprep.subr.mxu0 0.0
    %534 = vmatpush1.msra.mxu0 0.0
    %535 = vmatprep.subr.mxu0 0.0
    %536 = vmatpush1.msra.mxu0 0.0
    %537 = vmatprep.subr.mxu0 0.0
    %538 = vmatpush1.msra.mxu0 0.0
    %539 = vmatprep.subr.mxu0 0.0
    %540 = vmatpush1.msra.mxu0 0.0
    %541 = vmatprep.subr.mxu0 0.0
    %542 = vmatpush1.msra.mxu0 0.0
    %543 = vmatprep.subr.mxu0 0.0
    %544 = vmatpush1.msra.mxu0 0.0
    %545 = vmatprep.subr.mxu0 0.0
    %546 = vmatpush1.msra.mxu0 0.0
    %547 = vmatprep.subr.mxu0 0.0
    %548 = vmatpush1.msra.mxu0 0.0
    %549 = vmatprep.subr.mxu0 0.0
    %550 = vmatpush1.msra.mxu0 0.0
    %551 = vmatprep.mubr.f32.mxu0 0.0
    %552 = vmatmul.mubr.f32.gmra.mrb[0].mxu0 %v485
    %v553 = vpop.f32.mrb[0].mxu0
    %v554 = vadd.f32 %v481, %v553
    %v555 = vpop.f32.mrb[0].mxu0
    %556 = vdwg.mxu0
    %v557 = vmax.f32 %v554, -20.0
    %v558 = vmin.f32 %v557, 20.0
    %v559 = vxor.u32 %v558, 2147483648
    %v560 = vmul.f32 %v559, 1.442695
    %v561 = vpow.pop %v560
    %v562 = vadd.f32 %v561, 1.0
    %v563 = vrcp.pop %v562
    %v564 = vmul.f32 1.0, %v563
    %vm565 = vcmask 58368
    %566 = vst.msk [vmem:[#allocation2] sm:$0x3] %vm565, %v564
    %s567 = scalar_lea.vmem %s0, 2
    %v568 = vld [vmem:[%s567] sm:$0x3]
    %569 = vrot.lane.b32.xlu0 %v469, 8
    %v570 = vpop.permute.xlu0 %569
    %v572 = vsel %vm81, %v568, %v570
    %v574 = vsel %vm89, %v572, 0
    %576 = vmatprep.subr.mxu0 0.0
    %577 = vmatpush1.msra.mxu0 %v43
    %578 = vmatprep.subr.mxu0 0.0
    %579 = vmatpush1.msra.mxu0 %v44
    %580 = vmatprep.subr.mxu0 0.0
    %581 = vmatpush1.msra.mxu0 %v45
    %582 = vmatprep.subr.mxu0 0.0
    %583 = vmatpush1.msra.mxu0 %v46
    %584 = vmatprep.subr.mxu0 0.0
    %585 = vmatpush1.msra.mxu0 %v47
    %586 = vmatprep.subr.mxu0 0.0
    %587 = vmatpush1.msra.mxu0 0.0
    %588 = vmatprep.subr.mxu0 0.0
    %589 = vmatpush1.msra.mxu0 0.0
    %590 = vmatprep.subr.mxu0 0.0
    %591 = vmatpush1.msra.mxu0 0.0
    %592 = vmatprep.subr.mxu0 0.0
    %593 = vmatpush1.msra.mxu0 0.0
    %594 = vmatprep.subr.mxu0 0.0
    %595 = vmatpush1.msra.mxu0 0.0
    %596 = vmatprep.subr.mxu0 0.0
    %597 = vmatpush1.msra.mxu0 0.0
    %598 = vmatprep.subr.mxu0 0.0
    %599 = vmatpush1.msra.mxu0 0.0
    %600 = vmatprep.subr.mxu0 0.0
    %601 = vmatpush1.msra.mxu0 0.0
    %602 = vmatprep.subr.mxu0 0.0
    %603 = vmatpush1.msra.mxu0 0.0
    %604 = vmatprep.subr.mxu0 0.0
    %605 = vmatpush1.msra.mxu0 0.0
    %606 = vmatprep.subr.mxu0 0.0
    %607 = vmatpush1.msra.mxu0 0.0
    %608 = vmatprep.subr.mxu0 0.0
    %609 = vmatpush1.msra.mxu0 0.0
    %610 = vmatprep.subr.mxu0 0.0
    %611 = vmatpush1.msra.mxu0 0.0
    %612 = vmatprep.subr.mxu0 0.0
    %613 = vmatpush1.msra.mxu0 0.0
    %614 = vmatprep.subr.mxu0 0.0
    %615 = vmatpush1.msra.mxu0 0.0
    %616 = vmatprep.subr.mxu0 0.0
    %617 = vmatpush1.msra.mxu0 0.0
    %618 = vmatprep.subr.mxu0 0.0
    %619 = vmatpush1.msra.mxu0 0.0
    %620 = vmatprep.subr.mxu0 0.0
    %621 = vmatpush1.msra.mxu0 0.0
    %622 = vmatprep.subr.mxu0 0.0
    %623 = vmatpush1.msra.mxu0 0.0
    %624 = vmatprep.subr.mxu0 0.0
    %625 = vmatpush1.msra.mxu0 0.0
    %626 = vmatprep.subr.mxu0 0.0
    %627 = vmatpush1.msra.mxu0 0.0
    %628 = vmatprep.subr.mxu0 0.0
    %629 = vmatpush1.msra.mxu0 0.0
    %630 = vmatprep.subr.mxu0 0.0
    %631 = vmatpush1.msra.mxu0 0.0
    %632 = vmatprep.subr.mxu0 0.0
    %633 = vmatpush1.msra.mxu0 0.0
    %634 = vmatprep.subr.mxu0 0.0
    %635 = vmatpush1.msra.mxu0 0.0
    %636 = vmatprep.subr.mxu0 0.0
    %637 = vmatpush1.msra.mxu0 0.0
    %638 = vmatprep.subr.mxu0 0.0
    %639 = vmatpush1.msra.mxu0 0.0
    %640 = vmatprep.mubr.f32.mxu0 0.0
    %641 = vmatmul.mubr.f32.gmra.mrb[0].mxu0 %v574
    %v642 = vpop.f32.mrb[0].mxu0
    %v643 = vadd.f32 %v87, %v642
    %v644 = vpop.f32.mrb[0].mxu0
    %645 = vdwg.mxu0
    %v646 = vtanh.pop %v643
    %v648 = vsel %vm170, %v646, 0
    %650 = vmatprep.subr.mxu0 0.0
    %651 = vmatpush1.msra.mxu0 %v49
    %652 = vmatprep.subr.mxu0 0.0
    %653 = vmatpush1.msra.mxu0 %v50
    %654 = vmatprep.subr.mxu0 0.0
    %655 = vmatpush1.msra.mxu0 %v51
    %656 = vmatprep.subr.mxu0 0.0
    %657 = vmatpush1.msra.mxu0 %v52
    %658 = vmatprep.subr.mxu0 0.0
    %659 = vmatpush1.msra.mxu0 0.0
    %660 = vmatprep.subr.mxu0 0.0
    %661 = vmatpush1.msra.mxu0 0.0
    %662 = vmatprep.subr.mxu0 0.0
    %663 = vmatpush1.msra.mxu0 0.0
    %664 = vmatprep.subr.mxu0 0.0
    %665 = vmatpush1.msra.mxu0 0.0
    %666 = vmatprep.subr.mxu0 0.0
    %667 = vmatpush1.msra.mxu0 0.0
    %668 = vmatprep.subr.mxu0 0.0
    %669 = vmatpush1.msra.mxu0 0.0
    %670 = vmatprep.subr.mxu0 0.0
    %671 = vmatpush1.msra.mxu0 0.0
    %672 = vmatprep.subr.mxu0 0.0
    %673 = vmatpush1.msra.mxu0 0.0
    %674 = vmatprep.subr.mxu0 0.0
    %675 = vmatpush1.msra.mxu0 0.0
    %676 = vmatprep.subr.mxu0 0.0
    %677 = vmatpush1.msra.mxu0 0.0
    %678 = vmatprep.subr.mxu0 0.0
    %679 = vmatpush1.msra.mxu0 0.0
    %680 = vmatprep.subr.mxu0 0.0
    %681 = vmatpush1.msra.mxu0 0.0
    %682 = vmatprep.subr.mxu0 0.0
    %683 = vmatpush1.msra.mxu0 0.0
    %684 = vmatprep.subr.mxu0 0.0
    %685 = vmatpush1.msra.mxu0 0.0
    %686 = vmatprep.subr.mxu0 0.0
    %687 = vmatpush1.msra.mxu0 0.0
    %688 = vmatprep.subr.mxu0 0.0
    %689 = vmatpush1.msra.mxu0 0.0
    %690 = vmatprep.subr.mxu0 0.0
    %691 = vmatpush1.msra.mxu0 0.0
    %692 = vmatprep.subr.mxu0 0.0
    %693 = vmatpush1.msra.mxu0 0.0
    %694 = vmatprep.subr.mxu0 0.0
    %695 = vmatpush1.msra.mxu0 0.0
    %696 = vmatprep.subr.mxu0 0.0
    %697 = vmatpush1.msra.mxu0 0.0
    %698 = vmatprep.subr.mxu0 0.0
    %699 = vmatpush1.msra.mxu0 0.0
    %700 = vmatprep.subr.mxu0 0.0
    %701 = vmatpush1.msra.mxu0 0.0
    %702 = vmatprep.subr.mxu0 0.0
    %703 = vmatpush1.msra.mxu0 0.0
    %704 = vmatprep.subr.mxu0 0.0
    %705 = vmatpush1.msra.mxu0 0.0
    %706 = vmatprep.subr.mxu0 0.0
    %707 = vmatpush1.msra.mxu0 0.0
    %708 = vmatprep.subr.mxu0 0.0
    %709 = vmatpush1.msra.mxu0 0.0
    %710 = vmatprep.subr.mxu0 0.0
    %711 = vmatpush1.msra.mxu0 0.0
    %712 = vmatprep.subr.mxu0 0.0
    %713 = vmatpush1.msra.mxu0 0.0
    %714 = vmatprep.mubr.f32.mxu0 0.0
    %715 = vmatmul.mubr.f32.gmra.mrb[0].mxu0 %v648
    %v716 = vpop.f32.mrb[0].mxu0
    %v717 = vadd.f32 %v168, %v716
    %v718 = vpop.f32.mrb[0].mxu0
    %719 = vdwg.mxu0
    %v721 = vsel %vm170, %v717, 0
    %723 = vmatprep.subr.mxu0 0.0
    %724 = vmatpush1.msra.mxu0 %v63
    %725 = vmatprep.subr.mxu0 0.0
    %726 = vmatpush1.msra.mxu0 %v64
    %727 = vmatprep.subr.mxu0 0.0
    %728 = vmatpush1.msra.mxu0 %v65
    %729 = vmatprep.subr.mxu0 0.0
    %730 = vmatpush1.msra.mxu0 %v66
    %731 = vmatprep.subr.mxu0 0.0
    %732 = vmatpush1.msra.mxu0 0.0
    %733 = vmatprep.subr.mxu0 0.0
    %734 = vmatpush1.msra.mxu0 0.0
    %735 = vmatprep.subr.mxu0 0.0
    %736 = vmatpush1.msra.mxu0 0.0
    %737 = vmatprep.subr.mxu0 0.0
    %738 = vmatpush1.msra.mxu0 0.0
    %739 = vmatprep.subr.mxu0 0.0
    %740 = vmatpush1.msra.mxu0 0.0
    %741 = vmatprep.subr.mxu0 0.0
    %742 = vmatpush1.msra.mxu0 0.0
    %743 = vmatprep.subr.mxu0 0.0
    %744 = vmatpush1.msra.mxu0 0.0
    %745 = vmatprep.subr.mxu0 0.0
    %746 = vmatpush1.msra.mxu0 0.0
    %747 = vmatprep.subr.mxu0 0.0
    %748 = vmatpush1.msra.mxu0 0.0
    %749 = vmatprep.subr.mxu0 0.0
    %750 = vmatpush1.msra.mxu0 0.0
    %751 = vmatprep.subr.mxu0 0.0
    %752 = vmatpush1.msra.mxu0 0.0
    %753 = vmatprep.subr.mxu0 0.0
    %754 = vmatpush1.msra.mxu0 0.0
    %755 = vmatprep.subr.mxu0 0.0
    %756 = vmatpush1.msra.mxu0 0.0
    %757 = vmatprep.subr.mxu0 0.0
    %758 = vmatpush1.msra.mxu0 0.0
    %759 = vmatprep.subr.mxu0 0.0
    %760 = vmatpush1.msra.mxu0 0.0
    %761 = vmatprep.subr.mxu0 0.0
    %762 = vmatpush1.msra.mxu0 0.0
    %763 = vmatprep.subr.mxu0 0.0
    %764 = vmatpush1.msra.mxu0 0.0
    %765 = vmatprep.subr.mxu0 0.0
    %766 = vmatpush1.msra.mxu0 0.0
    %767 = vmatprep.subr.mxu0 0.0
    %768 = vmatpush1.msra.mxu0 0.0
    %769 = vmatprep.subr.mxu0 0.0
    %770 = vmatpush1.msra.mxu0 0.0
    %771 = vmatprep.subr.mxu0 0.0
    %772 = vmatpush1.msra.mxu0 0.0
    %773 = vmatprep.subr.mxu0 0.0
    %774 = vmatpush1.msra.mxu0 0.0
    %775 = vmatprep.subr.mxu0 0.0
    %776 = vmatpush1.msra.mxu0 0.0
    %777 = vmatprep.subr.mxu0 0.0
    %778 = vmatpush1.msra.mxu0 0.0
    %779 = vmatprep.subr.mxu0 0.0
    %780 = vmatpush1.msra.mxu0 0.0
    %781 = vmatprep.subr.mxu0 0.0
    %782 = vmatpush1.msra.mxu0 0.0
    %783 = vmatprep.subr.mxu0 0.0
    %784 = vmatpush1.msra.mxu0 0.0
    %785 = vmatprep.subr.mxu0 0.0
    %786 = vmatpush1.msra.mxu0 0.0
    %787 = vmatprep.mubr.f32.mxu0 0.0
    %788 = vmatmul.mubr.f32.gmra.mrb[0].mxu0 %v721
    %v789 = vpop.f32.mrb[0].mxu0
    %v790 = vadd.f32 0.0, %v789
    %v791 = vpop.f32.mrb[0].mxu0
    %792 = vdwg.mxu0
    %v793 = vsel %vm317, %v790, -inf
    %794 = vmax.xlane.f32.xlu0 %v793
    %v795 = vpop.xlane.xlu0 %794
    %v796 = vsub.f32 %v790, %v795
    %v797 = vmul.f32 %v796, 1.442695
    %v798 = vpow.pop %v797
    %v800 = vsel %vm170, %v798, 0
    %802 = vmatprep.subr.mxu0 0.0
    %803 = vmatpush1.msra.mxu0 %v67
    %804 = vmatprep.subr.mxu0 0.0
    %805 = vmatpush1.msra.mxu0 %v68
    %806 = vmatprep.subr.mxu0 0.0
    %807 = vmatpush1.msra.mxu0 %v69
    %808 = vmatprep.subr.mxu0 0.0
    %809 = vmatpush1.msra.mxu0 %v70
    %810 = vmatprep.subr.mxu0 0.0
    %811 = vmatpush1.msra.mxu0 0.0
    %812 = vmatprep.subr.mxu0 0.0
    %813 = vmatpush1.msra.mxu0 0.0
    %814 = vmatprep.subr.mxu0 0.0
    %815 = vmatpush1.msra.mxu0 0.0
    %816 = vmatprep.subr.mxu0 0.0
    %817 = vmatpush1.msra.mxu0 0.0
    %818 = vmatprep.subr.mxu0 0.0
    %819 = vmatpush1.msra.mxu0 0.0
    %820 = vmatprep.subr.mxu0 0.0
    %821 = vmatpush1.msra.mxu0 0.0
    %822 = vmatprep.subr.mxu0 0.0
    %823 = vmatpush1.msra.mxu0 0.0
    %824 = vmatprep.subr.mxu0 0.0
    %825 = vmatpush1.msra.mxu0 0.0
    %826 = vmatprep.subr.mxu0 0.0
    %827 = vmatpush1.msra.mxu0 0.0
    %828 = vmatprep.subr.mxu0 0.0
    %829 = vmatpush1.msra.mxu0 0.0
    %830 = vmatprep.subr.mxu0 0.0
    %831 = vmatpush1.msra.mxu0 0.0
    %832 = vmatprep.subr.mxu0 0.0
    %833 = vmatpush1.msra.mxu0 0.0
    %834 = vmatprep.subr.mxu0 0.0
    %835 = vmatpush1.msra.mxu0 0.0
    %836 = vmatprep.subr.mxu0 0.0
    %837 = vmatpush1.msra.mxu0 0.0
    %838 = vmatprep.subr.mxu0 0.0
    %839 = vmatpush1.msra.mxu0 0.0
    %840 = vmatprep.subr.mxu0 0.0
    %841 = vmatpush1.msra.mxu0 0.0
    %842 = vmatprep.subr.mxu0 0.0
    %843 = vmatpush1.msra.mxu0 0.0
    %844 = vmatprep.subr.mxu0 0.0
    %845 = vmatpush1.msra.mxu0 0.0
    %846 = vmatprep.subr.mxu0 0.0
    %847 = vmatpush1.msra.mxu0 0.0
    %848 = vmatprep.subr.mxu0 0.0
    %849 = vmatpush1.msra.mxu0 0.0
    %850 = vmatprep.subr.mxu0 0.0
    %851 = vmatpush1.msra.mxu0 0.0
    %852 = vmatprep.subr.mxu0 0.0
    %853 = vmatpush1.msra.mxu0 0.0
    %854 = vmatprep.subr.mxu0 0.0
    %855 = vmatpush1.msra.mxu0 0.0
    %856 = vmatprep.subr.mxu0 0.0
    %857 = vmatpush1.msra.mxu0 0.0
    %858 = vmatprep.subr.mxu0 0.0
    %859 = vmatpush1.msra.mxu0 0.0
    %860 = vmatprep.subr.mxu0 0.0
    %861 = vmatpush1.msra.mxu0 0.0
    %862 = vmatprep.subr.mxu0 0.0
    %863 = vmatpush1.msra.mxu0 0.0
    %864 = vmatprep.subr.mxu0 0.0
    %865 = vmatpush1.msra.mxu0 0.0
    %866 = vmatprep.mubr.f32.mxu0 0.0
    %867 = vmatmul.mubr.f32.gmra.mrb[0].mxu0 %v800
    %v868 = vpop.f32.mrb[0].mxu0
    %v869 = vadd.f32 0.0, %v868
    %v870 = vpop.f32.mrb[0].mxu0
    %871 = vdwg.mxu0
    %v872 = vrcp.pop %v869
    %v873 = vmul.f32 %v798, %v872
    %v875 = vsel %vm170, %v873, 0
    %877 = vmatprep.subr.mxu0 0.0
    %878 = vmatpush1.msra.mxu0 %v71
    %879 = vmatprep.subr.mxu0 0.0
    %880 = vmatpush1.msra.mxu0 %v72
    %881 = vmatprep.subr.mxu0 0.0
    %882 = vmatpush1.msra.mxu0 %v73
    %883 = vmatprep.subr.mxu0 0.0
    %884 = vmatpush1.msra.mxu0 %v74
    %885 = vmatprep.subr.mxu0 0.0
    %886 = vmatpush1.msra.mxu0 0.0
    %887 = vmatprep.subr.mxu0 0.0
    %888 = vmatpush1.msra.mxu0 0.0
    %889 = vmatprep.subr.mxu0 0.0
    %890 = vmatpush1.msra.mxu0 0.0
    %891 = vmatprep.subr.mxu0 0.0
    %892 = vmatpush1.msra.mxu0 0.0
    %893 = vmatprep.subr.mxu0 0.0
    %894 = vmatpush1.msra.mxu0 0.0
    %895 = vmatprep.subr.mxu0 0.0
    %896 = vmatpush1.msra.mxu0 0.0
    %897 = vmatprep.subr.mxu0 0.0
    %898 = vmatpush1.msra.mxu0 0.0
    %899 = vmatprep.subr.mxu0 0.0
    %900 = vmatpush1.msra.mxu0 0.0
    %901 = vmatprep.subr.mxu0 0.0
    %902 = vmatpush1.msra.mxu0 0.0
    %903 = vmatprep.subr.mxu0 0.0
    %904 = vmatpush1.msra.mxu0 0.0
    %905 = vmatprep.subr.mxu0 0.0
    %906 = vmatpush1.msra.mxu0 0.0
    %907 = vmatprep.subr.mxu0 0.0
    %908 = vmatpush1.msra.mxu0 0.0
    %909 = vmatprep.subr.mxu0 0.0
    %910 = vmatpush1.msra.mxu0 0.0
    %911 = vmatprep.subr.mxu0 0.0
    %912 = vmatpush1.msra.mxu0 0.0
    %913 = vmatprep.subr.mxu0 0.0
    %914 = vmatpush1.msra.mxu0 0.0
    %915 = vmatprep.subr.mxu0 0.0
    %916 = vmatpush1.msra.mxu0 0.0
    %917 = vmatprep.subr.mxu0 0.0
    %918 = vmatpush1.msra.mxu0 0.0
    %919 = vmatprep.subr.mxu0 0.0
    %920 = vmatpush1.msra.mxu0 0.0
    %921 = vmatprep.subr.mxu0 0.0
    %922 = vmatpush1.msra.mxu0 0.0
    %923 = vmatprep.subr.mxu0 0.0
    %924 = vmatpush1.msra.mxu0 0.0
    %925 = vmatprep.subr.mxu0 0.0
    %926 = vmatpush1.msra.mxu0 0.0
    %927 = vmatprep.subr.mxu0 0.0
    %928 = vmatpush1.msra.mxu0 0.0
    %929 = vmatprep.subr.mxu0 0.0
    %930 = vmatpush1.msra.mxu0 0.0
    %931 = vmatprep.subr.mxu0 0.0
    %932 = vmatpush1.msra.mxu0 0.0
    %933 = vmatprep.subr.mxu0 0.0
    %934 = vmatpush1.msra.mxu0 0.0
    %935 = vmatprep.subr.mxu0 0.0
    %936 = vmatpush1.msra.mxu0 0.0
    %937 = vmatprep.subr.mxu0 0.0
    %938 = vmatpush1.msra.mxu0 0.0
    %939 = vmatprep.subr.mxu0 0.0
    %940 = vmatpush1.msra.mxu0 0.0
    %941 = vmatprep.mubr.f32.mxu0 0.0
    %942 = vmatmul.mubr.f32.gmra.mrb[0].mxu0 %v875
    %v943 = vpop.f32.mrb[0].mxu0
    %v944 = vadd.f32 0.0, %v943
    %v945 = vpop.f32.mrb[0].mxu0
    %946 = vdwg.mxu0
    %948 = vrot.lane.b32.xlu0 %v944, 32
    %v949 = vpop.permute.xlu0 %948
    %v951 = vsel %vm170, %v646, %v949
    %v953 = vsel %vm483, %v951, 0
    %955 = vmatprep.subr.mxu0 0.0
    %956 = vmatpush1.msra.mxu0 %v54
    %957 = vmatprep.subr.mxu0 0.0
    %958 = vmatpush1.msra.mxu0 %v55
    %959 = vmatprep.subr.mxu0 0.0
    %960 = vmatpush1.msra.mxu0 %v56
    %961 = vmatprep.subr.mxu0 0.0
    %962 = vmatpush1.msra.mxu0 %v57
    %963 = vmatprep.subr.mxu0 0.0
    %964 = vmatpush1.msra.mxu0 %v58
    %965 = vmatprep.subr.mxu0 0.0
    %966 = vmatpush1.msra.mxu0 %v59
    %967 = vmatprep.subr.mxu0 0.0
    %968 = vmatpush1.msra.mxu0 %v60
    %969 = vmatprep.subr.mxu0 0.0
    %970 = vmatpush1.msra.mxu0 %v61
    %971 = vmatprep.subr.mxu0 0.0
    %972 = vmatpush1.msra.mxu0 0.0
    %973 = vmatprep.subr.mxu0 0.0
    %974 = vmatpush1.msra.mxu0 0.0
    %975 = vmatprep.subr.mxu0 0.0
    %976 = vmatpush1.msra.mxu0 0.0
    %977 = vmatprep.subr.mxu0 0.0
    %978 = vmatpush1.msra.mxu0 0.0
    %979 = vmatprep.subr.mxu0 0.0
    %980 = vmatpush1.msra.mxu0 0.0
    %981 = vmatprep.subr.mxu0 0.0
    %982 = vmatpush1.msra.mxu0 0.0
    %983 = vmatprep.subr.mxu0 0.0
    %984 = vmatpush1.msra.mxu0 0.0
    %985 = vmatprep.subr.mxu0 0.0
    %986 = vmatpush1.msra.mxu0 0.0
    %987 = vmatprep.subr.mxu0 0.0
    %988 = vmatpush1.msra.mxu0 0.0
    %989 = vmatprep.subr.mxu0 0.0
    %990 = vmatpush1.msra.mxu0 0.0
    %991 = vmatprep.subr.mxu0 0.0
    %992 = vmatpush1.msra.mxu0 0.0
    %993 = vmatprep.subr.mxu0 0.0
    %994 = vmatpush1.msra.mxu0 0.0
    %995 = vmatprep.subr.mxu0 0.0
    %996 = vmatpush1.msra.mxu0 0.0
    %997 = vmatprep.subr.mxu0 0.0
    %998 = vmatpush1.msra.mxu0 0.0
    %999 = vmatprep.subr.mxu0 0.0
    %1000 = vmatpush1.msra.mxu0 0.0
    %1001 = vmatprep.subr.mxu0 0.0
    %1002 = vmatpush1.msra.mxu0 0.0
    %1003 = vmatprep.subr.mxu0 0.0
    %1004 = vmatpush1.msra.mxu0 0.0
    %1005 = vmatprep.subr.mxu0 0.0
    %1006 = vmatpush1.msra.mxu0 0.0
    %1007 = vmatprep.subr.mxu0 0.0
    %1008 = vmatpush1.msra.mxu0 0.0
    %1009 = vmatprep.subr.mxu0 0.0
    %1010 = vmatpush1.msra.mxu0 0.0
    %1011 = vmatprep.subr.mxu0 0.0
    %1012 = vmatpush1.msra.mxu0 0.0
    %1013 = vmatprep.subr.mxu0 0.0
    %1014 = vmatpush1.msra.mxu0 0.0
    %1015 = vmatprep.subr.mxu0 0.0
    %1016 = vmatpush1.msra.mxu0 0.0
    %1017 = vmatprep.subr.mxu0 0.0
    %1018 = vmatpush1.msra.mxu0 0.0
    %1019 = vmatprep.mubr.f32.mxu0 0.0
    %1020 = vmatmul.mubr.f32.gmra.mrb[0].mxu0 %v953
    %v1021 = vpop.f32.mrb[0].mxu0
    %v1022 = vadd.f32 %v481, %v1021
    %v1023 = vpop.f32.mrb[0].mxu0
    %1024 = vdwg.mxu0
    %v1025 = vmax.f32 %v1022, -20.0
    %v1026 = vmin.f32 %v1025, 20.0
    %v1027 = vxor.u32 %v1026, 2147483648
    %v1028 = vmul.f32 %v1027, 1.442695
    %v1029 = vpow.pop %v1028
    %v1030 = vadd.f32 %v1029, 1.0
    %v1031 = vrcp.pop %v1030
    %v1032 = vmul.f32 1.0, %v1031
    %s1033 = scalar_lea.vmem [#allocation2], 2
    %1034 = vst.msk [vmem:[%s1033] sm:$0x3] %vm565, %v1032
    %s1035 = scalar_lea.vmem %s0, 4
    %v1036 = vld [vmem:[%s1035] sm:$0x3]
    %1037 = vrot.lane.b32.xlu0 %v944, 8
    %v1038 = vpop.permute.xlu0 %1037
    %v1040 = vsel %vm81, %v1036, %v1038
    %v1042 = vsel %vm89, %v1040, 0
    %1044 = vmatprep.subr.mxu0 0.0
    %1045 = vmatpush1.msra.mxu0 %v43
    %1046 = vmatprep.subr.mxu0 0.0
    %1047 = vmatpush1.msra.mxu0 %v44
    %1048 = vmatprep.subr.mxu0 0.0
    %1049 = vmatpush1.msra.mxu0 %v45
    %1050 = vmatprep.subr.mxu0 0.0
    %1051 = vmatpush1.msra.mxu0 %v46
    %1052 = vmatprep.subr.mxu0 0.0
    %1053 = vmatpush1.msra.mxu0 %v47
    %1054 = vmatprep.subr.mxu0 0.0
    %1055 = vmatpush1.msra.mxu0 0.0
    %1056 = vmatprep.subr.mxu0 0.0
    %1057 = vmatpush1.msra.mxu0 0.0
    %1058 = vmatprep.subr.mxu0 0.0
    %1059 = vmatpush1.msra.mxu0 0.0
    %1060 = vmatprep.subr.mxu0 0.0
    %1061 = vmatpush1.msra.mxu0 0.0
    %1062 = vmatprep.subr.mxu0 0.0
    %1063 = vmatpush1.msra.mxu0 0.0
    %1064 = vmatprep.subr.mxu0 0.0
    %1065 = vmatpush1.msra.mxu0 0.0
    %1066 = vmatprep.subr.mxu0 0.0
    %1067 = vmatpush1.msra.mxu0 0.0
    %1068 = vmatprep.subr.mxu0 0.0
    %1069 = vmatpush1.msra.mxu0 0.0
    %1070 = vmatprep.subr.mxu0 0.0
    %1071 = vmatpush1.msra.mxu0 0.0
    %1072 = vmatprep.subr.mxu0 0.0
    %1073 = vmatpush1.msra.mxu0 0.0
    %1074 = vmatprep.subr.mxu0 0.0
    %1075 = vmatpush1.msra.mxu0 0.0
    %1076 = vmatprep.subr.mxu0 0.0
    %1077 = vmatpush1.msra.mxu0 0.0
    %1078 = vmatprep.subr.mxu0 0.0
    %1079 = vmatpush1.msra.mxu0 0.0
    %1080 = vmatprep.subr.mxu0 0.0
    %1081 = vmatpush1.msra.mxu0 0.0
    %1082 = vmatprep.subr.mxu0 0.0
    %1083 = vmatpush1.msra.mxu0 0.0
    %1084 = vmatprep.subr.mxu0 0.0
    %1085 = vmatpush1.msra.mxu0 0.0
    %1086 = vmatprep.subr.mxu0 0.0
    %1087 = vmatpush1.msra.mxu0 0.0
    %1088 = vmatprep.subr.mxu0 0.0
    %1089 = vmatpush1.msra.mxu0 0.0
    %1090 = vmatprep.subr.mxu0 0.0
    %1091 = vmatpush1.msra.mxu0 0.0
    %1092 = vmatprep.subr.mxu0 0.0
    %1093 = vmatpush1.msra.mxu0 0.0
    %1094 = vmatprep.subr.mxu0 0.0
    %1095 = vmatpush1.msra.mxu0 0.0
    %1096 = vmatprep.subr.mxu0 0.0
    %1097 = vmatpush1.msra.mxu0 0.0
    %1098 = vmatprep.subr.mxu0 0.0
    %1099 = vmatpush1.msra.mxu0 0.0
    %1100 = vmatprep.subr.mxu0 0.0
    %1101 = vmatpush1.msra.mxu0 0.0
    %1102 = vmatprep.subr.mxu0 0.0
    %1103 = vmatpush1.msra.mxu0 0.0
    %1104 = vmatprep.subr.mxu0 0.0
    %1105 = vmatpush1.msra.mxu0 0.0
    %1106 = vmatprep.subr.mxu0 0.0
    %1107 = vmatpush1.msra.mxu0 0.0
    %1108 = vmatprep.mubr.f32.mxu0 0.0
    %1109 = vmatmul.mubr.f32.gmra.mrb[0].mxu0 %v1042
    %v1110 = vpop.f32.mrb[0].mxu0
    %v1111 = vadd.f32 %v87, %v1110
    %v1112 = vpop.f32.mrb[0].mxu0
    %1113 = vdwg.mxu0
    %v1114 = vtanh.pop %v1111
    %v1116 = vsel %vm170, %v1114, 0
    %1118 = vmatprep.subr.mxu0 0.0
    %1119 = vmatpush1.msra.mxu0 %v49
    %1120 = vmatprep.subr.mxu0 0.0
    %1121 = vmatpush1.msra.mxu0 %v50
    %1122 = vmatprep.subr.mxu0 0.0
    %1123 = vmatpush1.msra.mxu0 %v51
    %1124 = vmatprep.subr.mxu0 0.0
    %1125 = vmatpush1.msra.mxu0 %v52
    %1126 = vmatprep.subr.mxu0 0.0
    %1127 = vmatpush1.msra.mxu0 0.0
    %1128 = vmatprep.subr.mxu0 0.0
    %1129 = vmatpush1.msra.mxu0 0.0
    %1130 = vmatprep.subr.mxu0 0.0
    %1131 = vmatpush1.msra.mxu0 0.0
    %1132 = vmatprep.subr.mxu0 0.0
    %1133 = vmatpush1.msra.mxu0 0.0
    %1134 = vmatprep.subr.mxu0 0.0
    %1135 = vmatpush1.msra.mxu0 0.0
    %1136 = vmatprep.subr.mxu0 0.0
    %1137 = vmatpush1.msra.mxu0 0.0
    %1138 = vmatprep.subr.mxu0 0.0
    %1139 = vmatpush1.msra.mxu0 0.0
    %1140 = vmatprep.subr.mxu0 0.0
    %1141 = vmatpush1.msra.mxu0 0.0
    %1142 = vmatprep.subr.mxu0 0.0
    %1143 = vmatpush1.msra.mxu0 0.0
    %1144 = vmatprep.subr.mxu0 0.0
    %1145 = vmatpush1.msra.mxu0 0.0
    %1146 = vmatprep.subr.mxu0 0.0
    %1147 = vmatpush1.msra.mxu0 0.0
    %1148 = vmatprep.subr.mxu0 0.0
    %1149 = vmatpush1.msra.mxu0 0.0
    %1150 = vmatprep.subr.mxu0 0.0
    %1151 = vmatpush1.msra.mxu0 0.0
    %1152 = vmatprep.subr.mxu0 0.0
    %1153 = vmatpush1.msra.mxu0 0.0
    %1154 = vmatprep.subr.mxu0 0.0
    %1155 = vmatpush1.msra.mxu0 0.0
    %1156 = vmatprep.subr.mxu0 0.0
    %1157 = vmatpush1.msra.mxu0 0.0
    %1158 = vmatprep.subr.mxu0 0.0
    %1159 = vmatpush1.msra.mxu0 0.0
    %1160 = vmatprep.subr.mxu0 0.0
    %1161 = vmatpush1.msra.mxu0 0.0
    %1162 = vmatprep.subr.mxu0 0.0
    %1163 = vmatpush1.msra.mxu0 0.0
    %1164 = vmatprep.subr.mxu0 0.0
    %1165 = vmatpush1.msra.mxu0 0.0
    %1166 = vmatprep.subr.mxu0 0.0
    %1167 = vmatpush1.msra.mxu0 0.0
    %1168 = vmatprep.subr.mxu0 0.0
    %1169 = vmatpush1.msra.mxu0 0.0
    %1170 = vmatprep.subr.mxu0 0.0
    %1171 = vmatpush1.msra.mxu0 0.0
    %1172 = vmatprep.subr.mxu0 0.0
    %1173 = vmatpush1.msra.mxu0 0.0
    %1174 = vmatprep.subr.mxu0 0.0
    %1175 = vmatpush1.msra.mxu0 0.0
    %1176 = vmatprep.subr.mxu0 0.0
    %1177 = vmatpush1.msra.mxu0 0.0
    %1178 = vmatprep.subr.mxu0 0.0
    %1179 = vmatpush1.msra.mxu0 0.0
    %1180 = vmatprep.subr.mxu0 0.0
    %1181 = vmatpush1.msra.mxu0 0.0
    %1182 = vmatprep.mubr.f32.mxu0 0.0
    %1183 = vmatmul.mubr.f32.gmra.mrb[0].mxu0 %v1116
    %v1184 = vpop.f32.mrb[0].mxu0
    %v1185 = vadd.f32 %v168, %v1184
    %v1186 = vpop.f32.mrb[0].mxu0
    %1187 = vdwg.mxu0
    %v1189 = vsel %vm170, %v1185, 0
    %1191 = vmatprep.subr.mxu0 0.0
    %1192 = vmatpush1.msra.mxu0 %v63
    %1193 = vmatprep.subr.mxu0 0.0
    %1194 = vmatpush1.msra.mxu0 %v64
    %1195 = vmatprep.subr.mxu0 0.0
    %1196 = vmatpush1.msra.mxu0 %v65
    %1197 = vmatprep.subr.mxu0 0.0
    %1198 = vmatpush1.msra.mxu0 %v66
    %1199 = vmatprep.subr.mxu0 0.0
    %1200 = vmatpush1.msra.mxu0 0.0
    %1201 = vmatprep.subr.mxu0 0.0
    %1202 = vmatpush1.msra.mxu0 0.0
    %1203 = vmatprep.subr.mxu0 0.0
    %1204 = vmatpush1.msra.mxu0 0.0
    %1205 = vmatprep.subr.mxu0 0.0
    %1206 = vmatpush1.msra.mxu0 0.0
    %1207 = vmatprep.subr.mxu0 0.0
    %1208 = vmatpush1.msra.mxu0 0.0
    %1209 = vmatprep.subr.mxu0 0.0
    %1210 = vmatpush1.msra.mxu0 0.0
    %1211 = vmatprep.subr.mxu0 0.0
    %1212 = vmatpush1.msra.mxu0 0.0
    %1213 = vmatprep.subr.mxu0 0.0
    %1214 = vmatpush1.msra.mxu0 0.0
    %1215 = vmatprep.subr.mxu0 0.0
    %1216 = vmatpush1.msra.mxu0 0.0
    %1217 = vmatprep.subr.mxu0 0.0
    %1218 = vmatpush1.msra.mxu0 0.0
    %1219 = vmatprep.subr.mxu0 0.0
    %1220 = vmatpush1.msra.mxu0 0.0
    %1221 = vmatprep.subr.mxu0 0.0
    %1222 = vmatpush1.msra.mxu0 0.0
    %1223 = vmatprep.subr.mxu0 0.0
    %1224 = vmatpush1.msra.mxu0 0.0
    %1225 = vmatprep.subr.mxu0 0.0
    %1226 = vmatpush1.msra.mxu0 0.0
    %1227 = vmatprep.subr.mxu0 0.0
    %1228 = vmatpush1.msra.mxu0 0.0
    %1229 = vmatprep.subr.mxu0 0.0
    %1230 = vmatpush1.msra.mxu0 0.0
    %1231 = vmatprep.subr.mxu0 0.0
    %1232 = vmatpush1.msra.mxu0 0.0
    %1233 = vmatprep.subr.mxu0 0.0
    %1234 = vmatpush1.msra.mxu0 0.0
    %1235 = vmatprep.subr.mxu0 0.0
    %1236 = vmatpush1.msra.mxu0 0.0
    %1237 = vmatprep.subr.mxu0 0.0
    %1238 = vmatpush1.msra.mxu0 0.0
    %1239 = vmatprep.subr.mxu0 0.0
    %1240 = vmatpush1.msra.mxu0 0.0
    %1241 = vmatprep.subr.mxu0 0.0
    %1242 = vmatpush1.msra.mxu0 0.0
    %1243 = vmatprep.subr.mxu0 0.0
    %1244 = vmatpush1.msra.mxu0 0.0
    %1245 = vmatprep.subr.mxu0 0.0
    %1246 = vmatpush1.msra.mxu0 0.0
    %1247 = vmatprep.subr.mxu0 0.0
    %1248 = vmatpush1.msra.mxu0 0.0
    %1249 = vmatprep.subr.mxu0 0.0
    %1250 = vmatpush1.msra.mxu0 0.0
    %1251 = vmatprep.subr.mxu0 0.0
    %1252 = vmatpush1.msra.mxu0 0.0
    %1253 = vmatprep.subr.mxu0 0.0
    %1254 = vmatpush1.msra.mxu0 0.0
    %1255 = vmatprep.mubr.f32.mxu0 0.0
    %1256 = vmatmul.mubr.f32.gmra.mrb[0].mxu0 %v1189
    %v1257 = vpop.f32.mrb[0].mxu0
    %v1258 = vadd.f32 0.0, %v1257
    %v1259 = vpop.f32.mrb[0].mxu0
    %1260 = vdwg.mxu0
    %v1261 = vsel %vm317, %v1258, -inf
    %1262 = vmax.xlane.f32.xlu0 %v1261
    %v1263 = vpop.xlane.xlu0 %1262
    %v1264 = vsub.f32 %v1258, %v1263
    %v1265 = vmul.f32 %v1264, 1.442695
    %v1266 = vpow.pop %v1265
    %v1268 = vsel %vm170, %v1266, 0
    %1270 = vmatprep.subr.mxu0 0.0
    %1271 = vmatpush1.msra.mxu0 %v67
    %1272 = vmatprep.subr.mxu0 0.0
    %1273 = vmatpush1.msra.mxu0 %v68
    %1274 = vmatprep.subr.mxu0 0.0
    %1275 = vmatpush1.msra.mxu0 %v69
    %1276 = vmatprep.subr.mxu0 0.0
    %1277 = vmatpush1.msra.mxu0 %v70
    %1278 = vmatprep.subr.mxu0 0.0
    %1279 = vmatpush1.msra.mxu0 0.0
    %1280 = vmatprep.subr.mxu0 0.0
    %1281 = vmatpush1.msra.mxu0 0.0
    %1282 = vmatprep.subr.mxu0 0.0
    %1283 = vmatpush1.msra.mxu0 0.0
    %1284 = vmatprep.subr.mxu0 0.0
    %1285 = vmatpush1.msra.mxu0 0.0
    %1286 = vmatprep.subr.mxu0 0.0
    %1287 = vmatpush1.msra.mxu0 0.0
    %1288 = vmatprep.subr.mxu0 0.0
    %1289 = vmatpush1.msra.mxu0 0.0
    %1290 = vmatprep.subr.mxu0 0.0
    %1291 = vmatpush1.msra.mxu0 0.0
    %1292 = vmatprep.subr.mxu0 0.0
    %1293 = vmatpush1.msra.mxu0 0.0
    %1294 = vmatprep.subr.mxu0 0.0
    %1295 = vmatpush1.msra.mxu0 0.0
    %1296 = vmatprep.subr.mxu0 0.0
    %1297 = vmatpush1.msra.mxu0 0.0
    %1298 = vmatprep.subr.mxu0 0.0
    %1299 = vmatpush1.msra.mxu0 0.0
    %1300 = vmatprep.subr.mxu0 0.0
    %1301 = vmatpush1.msra.mxu0 0.0
    %1302 = vmatprep.subr.mxu0 0.0
    %1303 = vmatpush1.msra.mxu0 0.0
    %1304 = vmatprep.subr.mxu0 0.0
    %1305 = vmatpush1.msra.mxu0 0.0
    %1306 = vmatprep.subr.mxu0 0.0
    %1307 = vmatpush1.msra.mxu0 0.0
    %1308 = vmatprep.subr.mxu0 0.0
    %1309 = vmatpush1.msra.mxu0 0.0
    %1310 = vmatprep.subr.mxu0 0.0
    %1311 = vmatpush1.msra.mxu0 0.0
    %1312 = vmatprep.subr.mxu0 0.0
    %1313 = vmatpush1.msra.mxu0 0.0
    %1314 = vmatprep.subr.mxu0 0.0
    %1315 = vmatpush1.msra.mxu0 0.0
    %1316 = vmatprep.subr.mxu0 0.0
    %1317 = vmatpush1.msra.mxu0 0.0
    %1318 = vmatprep.subr.mxu0 0.0
    %1319 = vmatpush1.msra.mxu0 0.0
    %1320 = vmatprep.subr.mxu0 0.0
    %1321 = vmatpush1.msra.mxu0 0.0
    %1322 = vmatprep.subr.mxu0 0.0
    %1323 = vmatpush1.msra.mxu0 0.0
    %1324 = vmatprep.subr.mxu0 0.0
    %1325 = vmatpush1.msra.mxu0 0.0
    %1326 = vmatprep.subr.mxu0 0.0
    %1327 = vmatpush1.msra.mxu0 0.0
    %1328 = vmatprep.subr.mxu0 0.0
    %1329 = vmatpush1.msra.mxu0 0.0
    %1330 = vmatprep.subr.mxu0 0.0
    %1331 = vmatpush1.msra.mxu0 0.0
    %1332 = vmatprep.subr.mxu0 0.0
    %1333 = vmatpush1.msra.mxu0 0.0
    %1334 = vmatprep.mubr.f32.mxu0 0.0
    %1335 = vmatmul.mubr.f32.gmra.mrb[0].mxu0 %v1268
    %v1336 = vpop.f32.mrb[0].mxu0
    %v1337 = vadd.f32 0.0, %v1336
    %v1338 = vpop.f32.mrb[0].mxu0
    %1339 = vdwg.mxu0
    %v1340 = vrcp.pop %v1337
    %v1341 = vmul.f32 %v1266, %v1340
    %v1343 = vsel %vm170, %v1341, 0
    %1345 = vmatprep.subr.mxu0 0.0
    %1346 = vmatpush1.msra.mxu0 %v71
    %1347 = vmatprep.subr.mxu0 0.0
    %1348 = vmatpush1.msra.mxu0 %v72
    %1349 = vmatprep.subr.mxu0 0.0
    %1350 = vmatpush1.msra.mxu0 %v73
    %1351 = vmatprep.subr.mxu0 0.0
    %1352 = vmatpush1.msra.mxu0 %v74
    %1353 = vmatprep.subr.mxu0 0.0
    %1354 = vmatpush1.msra.mxu0 0.0
    %1355 = vmatprep.subr.mxu0 0.0
    %1356 = vmatpush1.msra.mxu0 0.0
    %1357 = vmatprep.subr.mxu0 0.0
    %1358 = vmatpush1.msra.mxu0 0.0
    %1359 = vmatprep.subr.mxu0 0.0
    %1360 = vmatpush1.msra.mxu0 0.0
    %1361 = vmatprep.subr.mxu0 0.0
    %1362 = vmatpush1.msra.mxu0 0.0
    %1363 = vmatprep.subr.mxu0 0.0
    %1364 = vmatpush1.msra.mxu0 0.0
    %1365 = vmatprep.subr.mxu0 0.0
    %1366 = vmatpush1.msra.mxu0 0.0
    %1367 = vmatprep.subr.mxu0 0.0
    %1368 = vmatpush1.msra.mxu0 0.0
    %1369 = vmatprep.subr.mxu0 0.0
    %1370 = vmatpush1.msra.mxu0 0.0
    %1371 = vmatprep.subr.mxu0 0.0
    %1372 = vmatpush1.msra.mxu0 0.0
    %1373 = vmatprep.subr.mxu0 0.0
    %1374 = vmatpush1.msra.mxu0 0.0
    %1375 = vmatprep.subr.mxu0 0.0
    %1376 = vmatpush1.msra.mxu0 0.0
    %1377 = vmatprep.subr.mxu0 0.0
    %1378 = vmatpush1.msra.mxu0 0.0
    %1379 = vmatprep.subr.mxu0 0.0
    %1380 = vmatpush1.msra.mxu0 0.0
    %1381 = vmatprep.subr.mxu0 0.0
    %1382 = vmatpush1.msra.mxu0 0.0
    %1383 = vmatprep.subr.mxu0 0.0
    %1384 = vmatpush1.msra.mxu0 0.0
    %1385 = vmatprep.subr.mxu0 0.0
    %1386 = vmatpush1.msra.mxu0 0.0
    %1387 = vmatprep.subr.mxu0 0.0
    %1388 = vmatpush1.msra.mxu0 0.0
    %1389 = vmatprep.subr.mxu0 0.0
    %1390 = vmatpush1.msra.mxu0 0.0
    %1391 = vmatprep.subr.mxu0 0.0
    %1392 = vmatpush1.msra.mxu0 0.0
    %1393 = vmatprep.subr.mxu0 0.0
    %1394 = vmatpush1.msra.mxu0 0.0
    %1395 = vmatprep.subr.mxu0 0.0
    %1396 = vmatpush1.msra.mxu0 0.0
    %1397 = vmatprep.subr.mxu0 0.0
    %1398 = vmatpush1.msra.mxu0 0.0
    %1399 = vmatprep.subr.mxu0 0.0
    %1400 = vmatpush1.msra.mxu0 0.0
    %1401 = vmatprep.subr.mxu0 0.0
    %1402 = vmatpush1.msra.mxu0 0.0
    %1403 = vmatprep.subr.mxu0 0.0
    %1404 = vmatpush1.msra.mxu0 0.0
    %1405 = vmatprep.subr.mxu0 0.0
    %1406 = vmatpush1.msra.mxu0 0.0
    %1407 = vmatprep.subr.mxu0 0.0
    %1408 = vmatpush1.msra.mxu0 0.0
    %1409 = vmatprep.mubr.f32.mxu0 0.0
    %1410 = vmatmul.mubr.f32.gmra.mrb[0].mxu0 %v1343
    %v1411 = vpop.f32.mrb[0].mxu0
    %v1412 = vadd.f32 0.0, %v1411
    %v1413 = vpop.f32.mrb[0].mxu0
    %1414 = vdwg.mxu0
    %1416 = vrot.lane.b32.xlu0 %v1412, 32
    %v1417 = vpop.permute.xlu0 %1416
    %v1419 = vsel %vm170, %v1114, %v1417
    %v1421 = vsel %vm483, %v1419, 0
    %1423 = vmatprep.subr.mxu0 0.0
    %1424 = vmatpush1.msra.mxu0 %v54
    %1425 = vmatprep.subr.mxu0 0.0
    %1426 = vmatpush1.msra.mxu0 %v55
    %1427 = vmatprep.subr.mxu0 0.0
    %1428 = vmatpush1.msra.mxu0 %v56
    %1429 = vmatprep.subr.mxu0 0.0
    %1430 = vmatpush1.msra.mxu0 %v57
    %1431 = vmatprep.subr.mxu0 0.0
    %1432 = vmatpush1.msra.mxu0 %v58
    %1433 = vmatprep.subr.mxu0 0.0
    %1434 = vmatpush1.msra.mxu0 %v59
    %1435 = vmatprep.subr.mxu0 0.0
    %1436 = vmatpush1.msra.mxu0 %v60
    %1437 = vmatprep.subr.mxu0 0.0
    %1438 = vmatpush1.msra.mxu0 %v61
    %1439 = vmatprep.subr.mxu0 0.0
    %1440 = vmatpush1.msra.mxu0 0.0
    %1441 = vmatprep.subr.mxu0 0.0
    %1442 = vmatpush1.msra.mxu0 0.0
    %1443 = vmatprep.subr.mxu0 0.0
    %1444 = vmatpush1.msra.mxu0 0.0
    %1445 = vmatprep.subr.mxu0 0.0
    %1446 = vmatpush1.msra.mxu0 0.0
    %1447 = vmatprep.subr.mxu0 0.0
    %1448 = vmatpush1.msra.mxu0 0.0
    %1449 = vmatprep.subr.mxu0 0.0
    %1450 = vmatpush1.msra.mxu0 0.0
    %1451 = vmatprep.subr.mxu0 0.0
    %1452 = vmatpush1.msra.mxu0 0.0
    %1453 = vmatprep.subr.mxu0 0.0
    %1454 = vmatpush1.msra.mxu0 0.0
    %1455 = vmatprep.subr.mxu0 0.0
    %1456 = vmatpush1.msra.mxu0 0.0
    %1457 = vmatprep.subr.mxu0 0.0
    %1458 = vmatpush1.msra.mxu0 0.0
    %1459 = vmatprep.subr.mxu0 0.0
    %1460 = vmatpush1.msra.mxu0 0.0
    %1461 = vmatprep.subr.mxu0 0.0
    %1462 = vmatpush1.msra.mxu0 0.0
    %1463 = vmatprep.subr.mxu0 0.0
    %1464 = vmatpush1.msra.mxu0 0.0
    %1465 = vmatprep.subr.mxu0 0.0
    %1466 = vmatpush1.msra.mxu0 0.0
    %1467 = vmatprep.subr.mxu0 0.0
    %1468 = vmatpush1.msra.mxu0 0.0
    %1469 = vmatprep.subr.mxu0 0.0
    %1470 = vmatpush1.msra.mxu0 0.0
    %1471 = vmatprep.subr.mxu0 0.0
    %1472 = vmatpush1.msra.mxu0 0.0
    %1473 = vmatprep.subr.mxu0 0.0
    %1474 = vmatpush1.msra.mxu0 0.0
    %1475 = vmatprep.subr.mxu0 0.0
    %1476 = vmatpush1.msra.mxu0 0.0
    %1477 = vmatprep.subr.mxu0 0.0
    %1478 = vmatpush1.msra.mxu0 0.0
    %1479 = vmatprep.subr.mxu0 0.0
    %1480 = vmatpush1.msra.mxu0 0.0
    %1481 = vmatprep.subr.mxu0 0.0
    %1482 = vmatpush1.msra.mxu0 0.0
    %1483 = vmatprep.subr.mxu0 0.0
    %1484 = vmatpush1.msra.mxu0 0.0
    %1485 = vmatprep.subr.mxu0 0.0
    %1486 = vmatpush1.msra.mxu0 0.0
    %1487 = vmatprep.mubr.f32.mxu0 0.0
    %1488 = vmatmul.mubr.f32.gmra.mrb[0].mxu0 %v1421
    %v1489 = vpop.f32.mrb[0].mxu0
    %v1490 = vadd.f32 %v481, %v1489
    %v1491 = vpop.f32.mrb[0].mxu0
    %1492 = vdwg.mxu0
    %v1493 = vmax.f32 %v1490, -20.0
    %v1494 = vmin.f32 %v1493, 20.0
    %v1495 = vxor.u32 %v1494, 2147483648
    %v1496 = vmul.f32 %v1495, 1.442695
    %v1497 = vpow.pop %v1496
    %v1498 = vadd.f32 %v1497, 1.0
    %v1499 = vrcp.pop %v1498
    %v1500 = vmul.f32 1.0, %v1499
    %s1501 = scalar_lea.vmem [#allocation2], 4
    %1502 = vst.msk [vmem:[%s1501] sm:$0x3] %vm565, %v1500
    %s1503 = scalar_lea.vmem %s0, 6
    %v1504 = vld [vmem:[%s1503] sm:$0x3]
    %1505 = vrot.lane.b32.xlu0 %v1412, 8
    %v1506 = vpop.permute.xlu0 %1505
    %v1508 = vsel %vm81, %v1504, %v1506
    %v1510 = vsel %vm89, %v1508, 0
    %1512 = vmatprep.subr.mxu0 0.0
    %1513 = vmatpush1.msra.mxu0 %v43
    %1514 = vmatprep.subr.mxu0 0.0
    %1515 = vmatpush1.msra.mxu0 %v44
    %1516 = vmatprep.subr.mxu0 0.0
    %1517 = vmatpush1.msra.mxu0 %v45
    %1518 = vmatprep.subr.mxu0 0.0
    %1519 = vmatpush1.msra.mxu0 %v46
    %1520 = vmatprep.subr.mxu0 0.0
    %1521 = vmatpush1.msra.mxu0 %v47
    %1522 = vmatprep.subr.mxu0 0.0
    %1523 = vmatpush1.msra.mxu0 0.0
    %1524 = vmatprep.subr.mxu0 0.0
    %1525 = vmatpush1.msra.mxu0 0.0
    %1526 = vmatprep.subr.mxu0 0.0
    %1527 = vmatpush1.msra.mxu0 0.0
    %1528 = vmatprep.subr.mxu0 0.0
    %1529 = vmatpush1.msra.mxu0 0.0
    %1530 = vmatprep.subr.mxu0 0.0
    %1531 = vmatpush1.msra.mxu0 0.0
    %1532 = vmatprep.subr.mxu0 0.0
    %1533 = vmatpush1.msra.mxu0 0.0
    %1534 = vmatprep.subr.mxu0 0.0
    %1535 = vmatpush1.msra.mxu0 0.0
    %1536 = vmatprep.subr.mxu0 0.0
    %1537 = vmatpush1.msra.mxu0 0.0
    %1538 = vmatprep.subr.mxu0 0.0
    %1539 = vmatpush1.msra.mxu0 0.0
    %1540 = vmatprep.subr.mxu0 0.0
    %1541 = vmatpush1.msra.mxu0 0.0
    %1542 = vmatprep.subr.mxu0 0.0
    %1543 = vmatpush1.msra.mxu0 0.0
    %1544 = vmatprep.subr.mxu0 0.0
    %1545 = vmatpush1.msra.mxu0 0.0
    %1546 = vmatprep.subr.mxu0 0.0
    %1547 = vmatpush1.msra.mxu0 0.0
    %1548 = vmatprep.subr.mxu0 0.0
    %1549 = vmatpush1.msra.mxu0 0.0
    %1550 = vmatprep.subr.mxu0 0.0
    %1551 = vmatpush1.msra.mxu0 0.0
    %1552 = vmatprep.subr.mxu0 0.0
    %1553 = vmatpush1.msra.mxu0 0.0
    %1554 = vmatprep.subr.mxu0 0.0
    %1555 = vmatpush1.msra.mxu0 0.0
    %1556 = vmatprep.subr.mxu0 0.0
    %1557 = vmatpush1.msra.mxu0 0.0
    %1558 = vmatprep.subr.mxu0 0.0
    %1559 = vmatpush1.msra.mxu0 0.0
    %1560 = vmatprep.subr.mxu0 0.0
    %1561 = vmatpush1.msra.mxu0 0.0
    %1562 = vmatprep.subr.mxu0 0.0
    %1563 = vmatpush1.msra.mxu0 0.0
    %1564 = vmatprep.subr.mxu0 0.0
    %1565 = vmatpush1.msra.mxu0 0.0
    %1566 = vmatprep.subr.mxu0 0.0
    %1567 = vmatpush1.msra.mxu0 0.0
    %1568 = vmatprep.subr.mxu0 0.0
    %1569 = vmatpush1.msra.mxu0 0.0
    %1570 = vmatprep.subr.mxu0 0.0
    %1571 = vmatpush1.msra.mxu0 0.0
    %1572 = vmatprep.subr.mxu0 0.0
    %1573 = vmatpush1.msra.mxu0 0.0
    %1574 = vmatprep.subr.mxu0 0.0
    %1575 = vmatpush1.msra.mxu0 0.0
    %1576 = vmatprep.mubr.f32.mxu0 0.0
    %1577 = vmatmul.mubr.f32.gmra.mrb[0].mxu0 %v1510
    %v1578 = vpop.f32.mrb[0].mxu0
    %v1579 = vadd.f32 %v87, %v1578
    %v1580 = vpop.f32.mrb[0].mxu0
    %1581 = vdwg.mxu0
    %v1582 = vtanh.pop %v1579
    %v1584 = vsel %vm170, %v1582, 0
    %1586 = vmatprep.subr.mxu0 0.0
    %1587 = vmatpush1.msra.mxu0 %v49
    %1588 = vmatprep.subr.mxu0 0.0
    %1589 = vmatpush1.msra.mxu0 %v50
    %1590 = vmatprep.subr.mxu0 0.0
    %1591 = vmatpush1.msra.mxu0 %v51
    %1592 = vmatprep.subr.mxu0 0.0
    %1593 = vmatpush1.msra.mxu0 %v52
    %1594 = vmatprep.subr.mxu0 0.0
    %1595 = vmatpush1.msra.mxu0 0.0
    %1596 = vmatprep.subr.mxu0 0.0
    %1597 = vmatpush1.msra.mxu0 0.0
    %1598 = vmatprep.subr.mxu0 0.0
    %1599 = vmatpush1.msra.mxu0 0.0
    %1600 = vmatprep.subr.mxu0 0.0
    %1601 = vmatpush1.msra.mxu0 0.0
    %1602 = vmatprep.subr.mxu0 0.0
    %1603 = vmatpush1.msra.mxu0 0.0
    %1604 = vmatprep.subr.mxu0 0.0
    %1605 = vmatpush1.msra.mxu0 0.0
    %1606 = vmatprep.subr.mxu0 0.0
    %1607 = vmatpush1.msra.mxu0 0.0
    %1608 = vmatprep.subr.mxu0 0.0
    %1609 = vmatpush1.msra.mxu0 0.0
    %1610 = vmatprep.subr.mxu0 0.0
    %1611 = vmatpush1.msra.mxu0 0.0
    %1612 = vmatprep.subr.mxu0 0.0
    %1613 = vmatpush1.msra.mxu0 0.0
    %1614 = vmatprep.subr.mxu0 0.0
    %1615 = vmatpush1.msra.mxu0 0.0
    %1616 = vmatprep.subr.mxu0 0.0
    %1617 = vmatpush1.msra.mxu0 0.0
    %1618 = vmatprep.subr.mxu0 0.0
    %1619 = vmatpush1.msra.mxu0 0.0
    %1620 = vmatprep.subr.mxu0 0.0
    %1621 = vmatpush1.msra.mxu0 0.0
    %1622 = vmatprep.subr.mxu0 0.0
    %1623 = vmatpush1.msra.mxu0 0.0
    %1624 = vmatprep.subr.mxu0 0.0
    %1625 = vmatpush1.msra.mxu0 0.0
    %1626 = vmatprep.subr.mxu0 0.0
    %1627 = vmatpush1.msra.mxu0 0.0
    %1628 = vmatprep.subr.mxu0 0.0
    %1629 = vmatpush1.msra.mxu0 0.0
    %1630 = vmatprep.subr.mxu0 0.0
    %1631 = vmatpush1.msra.mxu0 0.0
    %1632 = vmatprep.subr.mxu0 0.0
    %1633 = vmatpush1.msra.mxu0 0.0
    %1634 = vmatprep.subr.mxu0 0.0
    %1635 = vmatpush1.msra.mxu0 0.0
    %1636 = vmatprep.subr.mxu0 0.0
    %1637 = vmatpush1.msra.mxu0 0.0
    %1638 = vmatprep.subr.mxu0 0.0
    %1639 = vmatpush1.msra.mxu0 0.0
    %1640 = vmatprep.subr.mxu0 0.0
    %1641 = vmatpush1.msra.mxu0 0.0
    %1642 = vmatprep.subr.mxu0 0.0
    %1643 = vmatpush1.msra.mxu0 0.0
    %1644 = vmatprep.subr.mxu0 0.0
    %1645 = vmatpush1.msra.mxu0 0.0
    %1646 = vmatprep.subr.mxu0 0.0
    %1647 = vmatpush1.msra.mxu0 0.0
    %1648 = vmatprep.subr.mxu0 0.0
    %1649 = vmatpush1.msra.mxu0 0.0
    %1650 = vmatprep.mubr.f32.mxu0 0.0
    %1651 = vmatmul.mubr.f32.gmra.mrb[0].mxu0 %v1584
    %v1652 = vpop.f32.mrb[0].mxu0
    %v1653 = vadd.f32 %v168, %v1652
    %v1654 = vpop.f32.mrb[0].mxu0
    %1655 = vdwg.mxu0
    %v1657 = vsel %vm170, %v1653, 0
    %1659 = vmatprep.subr.mxu0 0.0
    %1660 = vmatpush1.msra.mxu0 %v63
    %1661 = vmatprep.subr.mxu0 0.0
    %1662 = vmatpush1.msra.mxu0 %v64
    %1663 = vmatprep.subr.mxu0 0.0
    %1664 = vmatpush1.msra.mxu0 %v65
    %1665 = vmatprep.subr.mxu0 0.0
    %1666 = vmatpush1.msra.mxu0 %v66
    %1667 = vmatprep.subr.mxu0 0.0
    %1668 = vmatpush1.msra.mxu0 0.0
    %1669 = vmatprep.subr.mxu0 0.0
    %1670 = vmatpush1.msra.mxu0 0.0
    %1671 = vmatprep.subr.mxu0 0.0
    %1672 = vmatpush1.msra.mxu0 0.0
    %1673 = vmatprep.subr.mxu0 0.0
    %1674 = vmatpush1.msra.mxu0 0.0
    %1675 = vmatprep.subr.mxu0 0.0
    %1676 = vmatpush1.msra.mxu0 0.0
    %1677 = vmatprep.subr.mxu0 0.0
    %1678 = vmatpush1.msra.mxu0 0.0
    %1679 = vmatprep.subr.mxu0 0.0
    %1680 = vmatpush1.msra.mxu0 0.0
    %1681 = vmatprep.subr.mxu0 0.0
    %1682 = vmatpush1.msra.mxu0 0.0
    %1683 = vmatprep.subr.mxu0 0.0
    %1684 = vmatpush1.msra.mxu0 0.0
    %1685 = vmatprep.subr.mxu0 0.0
    %1686 = vmatpush1.msra.mxu0 0.0
    %1687 = vmatprep.subr.mxu0 0.0
    %1688 = vmatpush1.msra.mxu0 0.0
    %1689 = vmatprep.subr.mxu0 0.0
    %1690 = vmatpush1.msra.mxu0 0.0
    %1691 = vmatprep.subr.mxu0 0.0
    %1692 = vmatpush1.msra.mxu0 0.0
    %1693 = vmatprep.subr.mxu0 0.0
    %1694 = vmatpush1.msra.mxu0 0.0
    %1695 = vmatprep.subr.mxu0 0.0
    %1696 = vmatpush1.msra.mxu0 0.0
    %1697 = vmatprep.subr.mxu0 0.0
    %1698 = vmatpush1.msra.mxu0 0.0
    %1699 = vmatprep.subr.mxu0 0.0
    %1700 = vmatpush1.msra.mxu0 0.0
    %1701 = vmatprep.subr.mxu0 0.0
    %1702 = vmatpush1.msra.mxu0 0.0
    %1703 = vmatprep.subr.mxu0 0.0
    %1704 = vmatpush1.msra.mxu0 0.0
    %1705 = vmatprep.subr.mxu0 0.0
    %1706 = vmatpush1.msra.mxu0 0.0
    %1707 = vmatprep.subr.mxu0 0.0
    %1708 = vmatpush1.msra.mxu0 0.0
    %1709 = vmatprep.subr.mxu0 0.0
    %1710 = vmatpush1.msra.mxu0 0.0
    %1711 = vmatprep.subr.mxu0 0.0
    %1712 = vmatpush1.msra.mxu0 0.0
    %1713 = vmatprep.subr.mxu0 0.0
    %1714 = vmatpush1.msra.mxu0 0.0
    %1715 = vmatprep.subr.mxu0 0.0
    %1716 = vmatpush1.msra.mxu0 0.0
    %1717 = vmatprep.subr.mxu0 0.0
    %1718 = vmatpush1.msra.mxu0 0.0
    %1719 = vmatprep.subr.mxu0 0.0
    %1720 = vmatpush1.msra.mxu0 0.0
    %1721 = vmatprep.subr.mxu0 0.0
    %1722 = vmatpush1.msra.mxu0 0.0
    %1723 = vmatprep.mubr.f32.mxu0 0.0
    %1724 = vmatmul.mubr.f32.gmra.mrb[0].mxu0 %v1657
    %v1725 = vpop.f32.mrb[0].mxu0
    %v1726 = vadd.f32 0.0, %v1725
    %v1727 = vpop.f32.mrb[0].mxu0
    %1728 = vdwg.mxu0
    %v1729 = vsel %vm317, %v1726, -inf
    %1730 = vmax.xlane.f32.xlu0 %v1729
    %v1731 = vpop.xlane.xlu0 %1730
    %v1732 = vsub.f32 %v1726, %v1731
    %v1733 = vmul.f32 %v1732, 1.442695
    %v1734 = vpow.pop %v1733
    %v1736 = vsel %vm170, %v1734, 0
    %1738 = vmatprep.subr.mxu0 0.0
    %1739 = vmatpush1.msra.mxu0 %v67
    %1740 = vmatprep.subr.mxu0 0.0
    %1741 = vmatpush1.msra.mxu0 %v68
    %1742 = vmatprep.subr.mxu0 0.0
    %1743 = vmatpush1.msra.mxu0 %v69
    %1744 = vmatprep.subr.mxu0 0.0
    %1745 = vmatpush1.msra.mxu0 %v70
    %1746 = vmatprep.subr.mxu0 0.0
    %1747 = vmatpush1.msra.mxu0 0.0
    %1748 = vmatprep.subr.mxu0 0.0
    %1749 = vmatpush1.msra.mxu0 0.0
    %1750 = vmatprep.subr.mxu0 0.0
    %1751 = vmatpush1.msra.mxu0 0.0
    %1752 = vmatprep.subr.mxu0 0.0
    %1753 = vmatpush1.msra.mxu0 0.0
    %1754 = vmatprep.subr.mxu0 0.0
    %1755 = vmatpush1.msra.mxu0 0.0
    %1756 = vmatprep.subr.mxu0 0.0
    %1757 = vmatpush1.msra.mxu0 0.0
    %1758 = vmatprep.subr.mxu0 0.0
    %1759 = vmatpush1.msra.mxu0 0.0
    %1760 = vmatprep.subr.mxu0 0.0
    %1761 = vmatpush1.msra.mxu0 0.0
    %1762 = vmatprep.subr.mxu0 0.0
    %1763 = vmatpush1.msra.mxu0 0.0
    %1764 = vmatprep.subr.mxu0 0.0
    %1765 = vmatpush1.msra.mxu0 0.0
    %1766 = vmatprep.subr.mxu0 0.0
    %1767 = vmatpush1.msra.mxu0 0.0
    %1768 = vmatprep.subr.mxu0 0.0
    %1769 = vmatpush1.msra.mxu0 0.0
    %1770 = vmatprep.subr.mxu0 0.0
    %1771 = vmatpush1.msra.mxu0 0.0
    %1772 = vmatprep.subr.mxu0 0.0
    %1773 = vmatpush1.msra.mxu0 0.0
    %1774 = vmatprep.subr.mxu0 0.0
    %1775 = vmatpush1.msra.mxu0 0.0
    %1776 = vmatprep.subr.mxu0 0.0
    %1777 = vmatpush1.msra.mxu0 0.0
    %1778 = vmatprep.subr.mxu0 0.0
    %1779 = vmatpush1.msra.mxu0 0.0
    %1780 = vmatprep.subr.mxu0 0.0
    %1781 = vmatpush1.msra.mxu0 0.0
    %1782 = vmatprep.subr.mxu0 0.0
    %1783 = vmatpush1.msra.mxu0 0.0
    %1784 = vmatprep.subr.mxu0 0.0
    %1785 = vmatpush1.msra.mxu0 0.0
    %1786 = vmatprep.subr.mxu0 0.0
    %1787 = vmatpush1.msra.mxu0 0.0
    %1788 = vmatprep.subr.mxu0 0.0
    %1789 = vmatpush1.msra.mxu0 0.0
    %1790 = vmatprep.subr.mxu0 0.0
    %1791 = vmatpush1.msra.mxu0 0.0
    %1792 = vmatprep.subr.mxu0 0.0
    %1793 = vmatpush1.msra.mxu0 0.0
    %1794 = vmatprep.subr.mxu0 0.0
    %1795 = vmatpush1.msra.mxu0 0.0
    %1796 = vmatprep.subr.mxu0 0.0
    %1797 = vmatpush1.msra.mxu0 0.0
    %1798 = vmatprep.subr.mxu0 0.0
    %1799 = vmatpush1.msra.mxu0 0.0
    %1800 = vmatprep.subr.mxu0 0.0
    %1801 = vmatpush1.msra.mxu0 0.0
    %1802 = vmatprep.mubr.f32.mxu0 0.0
    %1803 = vmatmul.mubr.f32.gmra.mrb[0].mxu0 %v1736
    %v1804 = vpop.f32.mrb[0].mxu0
    %v1805 = vadd.f32 0.0, %v1804
    %v1806 = vpop.f32.mrb[0].mxu0
    %1807 = vdwg.mxu0
    %v1808 = vrcp.pop %v1805
    %v1809 = vmul.f32 %v1734, %v1808
    %v1811 = vsel %vm170, %v1809, 0
    %1813 = vmatprep.subr.mxu0 0.0
    %1814 = vmatpush1.msra.mxu0 %v71
    %1815 = vmatprep.subr.mxu0 0.0
    %1816 = vmatpush1.msra.mxu0 %v72
    %1817 = vmatprep.subr.mxu0 0.0
    %1818 = vmatpush1.msra.mxu0 %v73
    %1819 = vmatprep.subr.mxu0 0.0
    %1820 = vmatpush1.msra.mxu0 %v74
    %1821 = vmatprep.subr.mxu0 0.0
    %1822 = vmatpush1.msra.mxu0 0.0
    %1823 = vmatprep.subr.mxu0 0.0
    %1824 = vmatpush1.msra.mxu0 0.0
    %1825 = vmatprep.subr.mxu0 0.0
    %1826 = vmatpush1.msra.mxu0 0.0
    %1827 = vmatprep.subr.mxu0 0.0
    %1828 = vmatpush1.msra.mxu0 0.0
    %1829 = vmatprep.subr.mxu0 0.0
    %1830 = vmatpush1.msra.mxu0 0.0
    %1831 = vmatprep.subr.mxu0 0.0
    %1832 = vmatpush1.msra.mxu0 0.0
    %1833 = vmatprep.subr.mxu0 0.0
    %1834 = vmatpush1.msra.mxu0 0.0
    %1835 = vmatprep.subr.mxu0 0.0
    %1836 = vmatpush1.msra.mxu0 0.0
    %1837 = vmatprep.subr.mxu0 0.0
    %1838 = vmatpush1.msra.mxu0 0.0
    %1839 = vmatprep.subr.mxu0 0.0
    %1840 = vmatpush1.msra.mxu0 0.0
    %1841 = vmatprep.subr.mxu0 0.0
    %1842 = vmatpush1.msra.mxu0 0.0
    %1843 = vmatprep.subr.mxu0 0.0
    %1844 = vmatpush1.msra.mxu0 0.0
    %1845 = vmatprep.subr.mxu0 0.0
    %1846 = vmatpush1.msra.mxu0 0.0
    %1847 = vmatprep.subr.mxu0 0.0
    %1848 = vmatpush1.msra.mxu0 0.0
    %1849 = vmatprep.subr.mxu0 0.0
    %1850 = vmatpush1.msra.mxu0 0.0
    %1851 = vmatprep.subr.mxu0 0.0
    %1852 = vmatpush1.msra.mxu0 0.0
    %1853 = vmatprep.subr.mxu0 0.0
    %1854 = vmatpush1.msra.mxu0 0.0
    %1855 = vmatprep.subr.mxu0 0.0
    %1856 = vmatpush1.msra.mxu0 0.0
    %1857 = vmatprep.subr.mxu0 0.0
    %1858 = vmatpush1.msra.mxu0 0.0
    %1859 = vmatprep.subr.mxu0 0.0
    %1860 = vmatpush1.msra.mxu0 0.0
    %1861 = vmatprep.subr.mxu0 0.0
    %1862 = vmatpush1.msra.mxu0 0.0
    %1863 = vmatprep.subr.mxu0 0.0
    %1864 = vmatpush1.msra.mxu0 0.0
    %1865 = vmatprep.subr.mxu0 0.0
    %1866 = vmatpush1.msra.mxu0 0.0
    %1867 = vmatprep.subr.mxu0 0.0
    %1868 = vmatpush1.msra.mxu0 0.0
    %1869 = vmatprep.subr.mxu0 0.0
    %1870 = vmatpush1.msra.mxu0 0.0
    %1871 = vmatprep.subr.mxu0 0.0
    %1872 = vmatpush1.msra.mxu0 0.0
    %1873 = vmatprep.subr.mxu0 0.0
    %1874 = vmatpush1.msra.mxu0 0.0
    %1875 = vmatprep.subr.mxu0 0.0
    %1876 = vmatpush1.msra.mxu0 0.0
    %1877 = vmatprep.mubr.f32.mxu0 0.0
    %1878 = vmatmul.mubr.f32.gmra.mrb[0].mxu0 %v1811
    %v1879 = vpop.f32.mrb[0].mxu0
    %v1880 = vadd.f32 0.0, %v1879
    %v1881 = vpop.f32.mrb[0].mxu0
    %1882 = vdwg.mxu0
    %1884 = vrot.lane.b32.xlu0 %v1880, 32
    %v1885 = vpop.permute.xlu0 %1884
    %v1887 = vsel %vm170, %v1582, %v1885
    %v1889 = vsel %vm483, %v1887, 0
    %1891 = vmatprep.subr.mxu0 0.0
    %1892 = vmatpush1.msra.mxu0 %v54
    %1893 = vmatprep.subr.mxu0 0.0
    %1894 = vmatpush1.msra.mxu0 %v55
    %1895 = vmatprep.subr.mxu0 0.0
    %1896 = vmatpush1.msra.mxu0 %v56
    %1897 = vmatprep.subr.mxu0 0.0
    %1898 = vmatpush1.msra.mxu0 %v57
    %1899 = vmatprep.subr.mxu0 0.0
    %1900 = vmatpush1.msra.mxu0 %v58
    %1901 = vmatprep.subr.mxu0 0.0
    %1902 = vmatpush1.msra.mxu0 %v59
    %1903 = vmatprep.subr.mxu0 0.0
    %1904 = vmatpush1.msra.mxu0 %v60
    %1905 = vmatprep.subr.mxu0 0.0
    %1906 = vmatpush1.msra.mxu0 %v61
    %1907 = vmatprep.subr.mxu0 0.0
    %1908 = vmatpush1.msra.mxu0 0.0
    %1909 = vmatprep.subr.mxu0 0.0
    %1910 = vmatpush1.msra.mxu0 0.0
    %1911 = vmatprep.subr.mxu0 0.0
    %1912 = vmatpush1.msra.mxu0 0.0
    %1913 = vmatprep.subr.mxu0 0.0
    %1914 = vmatpush1.msra.mxu0 0.0
    %1915 = vmatprep.subr.mxu0 0.0
    %1916 = vmatpush1.msra.mxu0 0.0
    %1917 = vmatprep.subr.mxu0 0.0
    %1918 = vmatpush1.msra.mxu0 0.0
    %1919 = vmatprep.subr.mxu0 0.0
    %1920 = vmatpush1.msra.mxu0 0.0
    %1921 = vmatprep.subr.mxu0 0.0
    %1922 = vmatpush1.msra.mxu0 0.0
    %1923 = vmatprep.subr.mxu0 0.0
    %1924 = vmatpush1.msra.mxu0 0.0
    %1925 = vmatprep.subr.mxu0 0.0
    %1926 = vmatpush1.msra.mxu0 0.0
    %1927 = vmatprep.subr.mxu0 0.0
    %1928 = vmatpush1.msra.mxu0 0.0
    %1929 = vmatprep.subr.mxu0 0.0
    %1930 = vmatpush1.msra.mxu0 0.0
    %1931 = vmatprep.subr.mxu0 0.0
    %1932 = vmatpush1.msra.mxu0 0.0
    %1933 = vmatprep.subr.mxu0 0.0
    %1934 = vmatpush1.msra.mxu0 0.0
    %1935 = vmatprep.subr.mxu0 0.0
    %1936 = vmatpush1.msra.mxu0 0.0
    %1937 = vmatprep.subr.mxu0 0.0
    %1938 = vmatpush1.msra.mxu0 0.0
    %1939 = vmatprep.subr.mxu0 0.0
    %1940 = vmatpush1.msra.mxu0 0.0
    %1941 = vmatprep.subr.mxu0 0.0
    %1942 = vmatpush1.msra.mxu0 0.0
    %1943 = vmatprep.subr.mxu0 0.0
    %1944 = vmatpush1.msra.mxu0 0.0
    %1945 = vmatprep.subr.mxu0 0.0
    %1946 = vmatpush1.msra.mxu0 0.0
    %1947 = vmatprep.subr.mxu0 0.0
    %1948 = vmatpush1.msra.mxu0 0.0
    %1949 = vmatprep.subr.mxu0 0.0
    %1950 = vmatpush1.msra.mxu0 0.0
    %1951 = vmatprep.subr.mxu0 0.0
    %1952 = vmatpush1.msra.mxu0 0.0
    %1953 = vmatprep.subr.mxu0 0.0
    %1954 = vmatpush1.msra.mxu0 0.0
    %1955 = vmatprep.mubr.f32.mxu0 0.0
    %1956 = vmatmul.mubr.f32.gmra.mrb[0].mxu0 %v1889
    %v1957 = vpop.f32.mrb[0].mxu0
    %v1958 = vadd.f32 %v481, %v1957
    %v1959 = vpop.f32.mrb[0].mxu0
    %1960 = vdwg.mxu0
    %v1961 = vmax.f32 %v1958, -20.0
    %v1962 = vmin.f32 %v1961, 20.0
    %v1963 = vxor.u32 %v1962, 2147483648
    %v1964 = vmul.f32 %v1963, 1.442695
    %v1965 = vpow.pop %v1964
    %v1966 = vadd.f32 %v1965, 1.0
    %v1967 = vrcp.pop %v1966
    %v1968 = vmul.f32 1.0, %v1967
    %s1969 = scalar_lea.vmem [#allocation2], 6
    %1970 = vst.msk [vmem:[%s1969] sm:$0x3] %vm565, %v1968
    %1971 = vst.msk [vmem:[#allocation4] sm:$0x3] %vm317, %v1880
    %1972 = vst.msk [vmem:[#allocation6] sm:$0x3] %vm317, %v1582
    // Predicated region
    $region46: #{tpu_custom_call.1} parent=1 // pred_check
      _
    $region47: #{tpu_custom_call.1} parent=1 // pred_check_branch
      %1974 = sbr.rel (0) target = $region49
    $region48: #{tpu_custom_call.1} parent=1 // pred_region
      %s1976 = ssub.s32 128, 128
      %1977 = vsyncadd [#allocation3], %s1976
      %s1978 = sshll.u32 [#allocation2], 4
      %s1979 = int_to_ptr.vmem [resolvable:$true] %s1978
      %1984 = dma.vmem_to_hbm [thread:$0]  %s1979, 128, %s11, [#allocation3], 32, 32, 2
    $region49: #{tpu_custom_call.1} parent=1 // pred_fallthru
      _
    // Predicated region
    $region50: #{tpu_custom_call.1} parent=1 // pred_check
      _
    $region51: #{tpu_custom_call.1} parent=1 // pred_check_branch
      %1986 = sbr.rel (0) target = $region53
    $region52: #{tpu_custom_call.1} parent=1 // pred_region
      %s1988 = ssub.s32 32, 32
      %1989 = vsyncadd [#allocation5], %s1988
      %s1991 = sshll.u32 [#allocation4], 4
      %s1992 = int_to_ptr.vmem [resolvable:$true] %s1991
      %1994 = dma.vmem_to_hbm [thread:$0]  %s1992, 32, %s12, [#allocation5]
    $region53: #{tpu_custom_call.1} parent=1 // pred_fallthru
      _
    // Predicated region
    $region54: #{tpu_custom_call.1} parent=1 // pred_check
      _
    $region55: #{tpu_custom_call.1} parent=1 // pred_check_branch
      %1996 = sbr.rel (0) target = $region57
    $region56: #{tpu_custom_call.1} parent=1 // pred_region
      %s1998 = ssub.s32 32, 32
      %1999 = vsyncadd [#allocation5], %s1998
      %s2001 = sshll.u32 [#allocation6], 4
      %s2002 = int_to_ptr.vmem [resolvable:$true] %s2001
      %2004 = dma.vmem_to_hbm [thread:$0]  %s2002, 32, %s13, [#allocation5]
    $region57: #{tpu_custom_call.1} parent=1 // pred_fallthru
      _
    // Predicated region
    $region58: #{tpu_custom_call.1} parent=1 // pred_check
      _
    $region59: #{tpu_custom_call.1} parent=1 // pred_check_branch
      %2006 = sbr.rel (0) target = $region61
    $region60: #{tpu_custom_call.1} parent=1 // pred_region
      %2007 = dma.done [#allocation3], 128
    $region61: #{tpu_custom_call.1} parent=1 // pred_fallthru
      _
    // Predicated region
    $region62: #{tpu_custom_call.1} parent=1 // pred_check
      _
    $region63: #{tpu_custom_call.1} parent=1 // pred_check_branch
      %2009 = sbr.rel (0) target = $region65
    $region64: #{tpu_custom_call.1} parent=1 // pred_region
      %2010 = dma.done [#allocation5], 32
    $region65: #{tpu_custom_call.1} parent=1 // pred_fallthru
      _
    // Predicated region
    $region66: #{tpu_custom_call.1} parent=1 // pred_check
      _
    $region67: #{tpu_custom_call.1} parent=1 // pred_check_branch
      %2012 = sbr.rel (0) target = $region69
    $region68: #{tpu_custom_call.1} parent=1 // pred_region
      %2013 = dma.done [#allocation5], 32
    $region69: #{tpu_custom_call.1} parent=1 // pred_fallthru
      _
    %2014 = vsyncpa [#allocation3], 1
    %2015 = vsyncpa [#allocation5], 1

</llo_original>
